<compile_context>
chip_gen: v7x
topology: tpu7x:2x2x1
jax: 0.10.0
libtpu: 0.0.40
codegen_flags: <defaults>
</compile_context>

<pallas_src>
import math

import jax
import jax.numpy as jnp
from jax import lax
from jax.experimental import pallas as pl
from jax.experimental.pallas import tpu as pltpu


def _round_up(a, m):
    return ((a + m - 1) // m) * m


def _mlp_kernel(x_ref, w1_ref, b1_ref, w2_ref, b2_ref, o_ref):
    # x_ref : (TB, D)   batch tile (sublanes), features on lanes
    # w1_ref: (Hp, D)   fc1 weight (PyTorch layout), hidden on sublanes
    # b1_ref: (Hp, 1)
    # w2_ref: (1, Hp)   fc2 weight as a row
    # b2_ref: (1, 1)
    # o_ref : (1, TB)   lane-dense output row
    #
    # fc1:  h[Hp, TB] = W1 @ x^T  — NT contraction (last dim of both operands),
    # the same MXU-native pattern as flash attention's q.k^T.
    h = lax.dot_general(
        w1_ref[...],
        x_ref[...],
        dimension_numbers=(((1,), (1,)), ((), ())),
        preferred_element_type=jnp.float32,
    )
    # Epilogue on the VPU: bias + ReLU only (2 ops per h element).
    h = jnp.maximum(h + b1_ref[...], 0.0)
    # fc2 on the MXU: [1, Hp] @ [Hp, TB] -> lane-dense (1, TB) row.
    out = lax.dot_general(
        w2_ref[...],
        h,
        dimension_numbers=(((1,), (0,)), ((), ())),
        preferred_element_type=jnp.float32,
    ) + b2_ref[...]
    o_ref[...] = out.astype(o_ref.dtype)


def network_exploitation_forward(x, w1, b1, w2, b2, *, batch_tile=None,
                                 min_pallas_batch=1024):
    """Forward pass of Network_exploitation.

    x : (B, dim)       float32
    w1: (hidden, dim)  -- PyTorch fc1.weight layout
    b1: (hidden,)
    w2: (1, hidden)    -- PyTorch fc2.weight layout
    b2: (1,)
    Returns (B, 1) == relu(x @ w1.T + b1) @ w2.T + b2
    """
    B, dim = x.shape
    hidden = w1.shape[0]

    # ---- small-batch fast path (launch/tiling overhead dominates) ---------
    if B < min_pallas_batch:
        return jnp.maximum(x @ w1.T + b1, 0.0) @ w2.T + b2

    # ---- padded hidden size (cheap, weight-only pad; exact) ---------------
    Hp = _round_up(max(hidden, 8), 128)
    dim_pad = _round_up(dim, 128)  # lane padding of VMEM buffers (layout only)

    # ---- batch tile sizing -------------------------------------------------
    # (1) amortize per-step overhead: ~2 MiB of real x bytes per grid step.
    target_stream_bytes = 2 << 20
    tile = _round_up(max(target_stream_bytes // (4 * dim), 128), 128)

    # (2) cap by a conservative per-step VMEM estimate (bytes):
    #     x double-buffered (lane-padded) : 2 * dim_pad * 4   per batch row
    #     h and relu(h) f32 (Hp, tile)    : 2 * Hp * 4        per batch row
    #     output (1,tile)->(8,tile) x2    : 64                per batch row
    #     resident weights (double-buffered) are a small constant.
    per_row_bytes = 4 * (2 * dim_pad + 2 * Hp) + 64
    const_bytes = 2 * 4 * (Hp * dim_pad + Hp * 128 + 8 * Hp + 1024)
    vmem_budget = 12 << 20  # fits v5e's 16 MiB scoped default with headroom
    tile_vmem_cap = max((vmem_budget - const_bytes) // per_row_bytes, 128)
    tile = min(tile, (tile_vmem_cap // 128) * 128)
    # (3) never larger than the (128-rounded) batch; optional manual override.
    tile = min(tile, _round_up(B, 128))
    if batch_tile is not None:
        tile = min(tile, _round_up(max(batch_tile, 128), 128))
    tile = max(tile, 128)

    # Final block may be partial: Pallas clips the input DMA and the output
    # writeback to the array bounds.  Garbage rows in the un-filled tile only
    # affect output columns >= B (no reduction across the batch axis), which
    # are never written back.
    num_tiles = pl.cdiv(B, tile)

    # ---- tiny zero-pads on weights only (never on the x stream) -----------
    w1_p = jnp.pad(w1, ((0, Hp - hidden), (0, 0)))
    b1_p = jnp.pad(b1, (0, Hp - hidden)).reshape(Hp, 1)
    w2_p = jnp.pad(w2, ((0, 0), (0, Hp - hidden)))
    b2_p = b2.reshape(1, 1)

    out_row = pl.pallas_call(
        _mlp_kernel,
        out_shape=jax.ShapeDtypeStruct((1, B), x.dtype),
        grid_spec=pltpu.PrefetchScalarGridSpec(
            num_scalar_prefetch=0,
            grid=(num_tiles,),
            in_specs=[
                pl.BlockSpec((tile, dim), lambda i: (i, 0)),  # x: batch-tiled
                pl.BlockSpec((Hp, dim), lambda i: (0, 0)),    # W1: VMEM-resident
                pl.BlockSpec((Hp, 1), lambda i: (0, 0)),      # b1
                pl.BlockSpec((1, Hp), lambda i: (0, 0)),      # w2 row
                pl.BlockSpec((1, 1), lambda i: (0, 0)),       # b2
            ],
            out_specs=pl.BlockSpec((1, tile), lambda i: (0, i)),  # lane-dense row
        ),
        compiler_params=pltpu.CompilerParams(
            dimension_semantics=("parallel",),  # batch axis shards across v7x TCs
            vmem_limit_bytes=32 << 20,          # safe on v5e/v6e/v7x physical VMEM
        ),
    )(x, w1_p, b1_p, w2_p, b2_p)

    # Lane-dense (1, B) row -> (B, 1) column expected by the module.
    return out_row.reshape(B, 1)


if __name__ == "__main__":
    key = jax.random.PRNGKey(0)
    k_x, k1, k2, k3, k4, k_x2 = jax.random.split(key, 6)

    dim, hidden = 32, 100

    # nn.Linear-style init, PyTorch weight layouts.
    bound1 = 1.0 / math.sqrt(dim)
    bound2 = 1.0 / math.sqrt(hidden)
    w1 = jax.random.uniform(k1, (hidden, dim), jnp.float32, -bound1, bound1)
    b1 = jax.random.uniform(k2, (hidden,), jnp.float32, -bound1, bound1)
    w2 = jax.random.uniform(k3, (1, hidden), jnp.float32, -bound2, bound2)
    b2 = jax.random.uniform(k4, (1,), jnp.float32, -bound2, bound2)

    def ref_fn(xx):
        return jnp.maximum(xx @ w1.T + b1, 0.0) @ w2.T + b2

    # 1) Module-typical tiny batch -> small-B fast path (no kernel launch).
    x_small = jax.random.normal(k_x, (8, dim), jnp.float32)
    out_small = jax.block_until_ready(
        network_exploitation_forward(x_small, w1, b1, w2, b2))
    assert out_small.shape == (8, 1), out_small.shape
    assert jnp.allclose(out_small, ref_fn(x_small), atol=1e-5, rtol=1e-5)

    # 2) Batch on the Pallas path; not a multiple of the tile, so we exercise
    #    multi-step tiling AND a partial/clipped final block (no host pad).
    B = 4196
    x_big = jax.random.normal(k_x2, (B, dim), jnp.float32)
    out_big = jax.block_until_ready(
        network_exploitation_forward(x_big, w1, b1, w2, b2, batch_tile=1024))
    assert out_big.shape == (B, 1), out_big.shape
    assert jnp.allclose(out_big, ref_fn(x_big), atol=1e-4, rtol=1e-4)

    # 3) Same batch with the auto (bytes-per-step / VMEM-budgeted) tile size.
    out_big2 = jax.block_until_ready(
        network_exploitation_forward(x_big, w1, b1, w2, b2))
    assert jnp.allclose(out_big2, ref_fn(x_big), atol=1e-4, rtol=1e-4)

    print("KERNEL_OK")
</pallas_src>

<mosaic_0001>
module attributes {stable_mosaic.version = 11 : i64} {
  func.func @_mlp_kernel(%arg0: i32, %arg1: memref<1024x32xf32, #tpu.memory_space<vmem>>, %arg2: memref<128x32xf32, #tpu.memory_space<vmem>>, %arg3: memref<128x1xf32, #tpu.memory_space<vmem>>, %arg4: memref<1x128xf32, #tpu.memory_space<vmem>>, %arg5: memref<1x1xf32, #tpu.memory_space<vmem>>, %arg6: memref<1x1024xf32, #tpu.memory_space<vmem>>) attributes {dimension_semantics = [#tpu.dimension_semantics<parallel>], iteration_bounds = array<i64: 5>, scalar_prefetch = 0 : i64, scratch_operands = 0 : i64, tpu.core_type = #tpu.core_type<tc>, window_params = [{transform_indices = @transform_0, window_bounds = array<i64: 1024, 32>}, {pipeline_mode = #tpu.pipeline_mode<synchronous>, transform_indices = @transform_1, window_bounds = array<i64: 128, 32>}, {pipeline_mode = #tpu.pipeline_mode<synchronous>, transform_indices = @transform_2, window_bounds = array<i64: 128, 1>}, {pipeline_mode = #tpu.pipeline_mode<synchronous>, transform_indices = @transform_3, window_bounds = array<i64: 1, 128>}, {pipeline_mode = #tpu.pipeline_mode<synchronous>, transform_indices = @transform_4, window_bounds = array<i64: 1, 1>}, {transform_indices = @transform_5, window_bounds = array<i64: 1, 1024>}]} {
    %c0 = arith.constant 0 : index
    %c0_0 = arith.constant 0 : index
    %0 = vector.load %arg2[%c0, %c0_0] : memref<128x32xf32, #tpu.memory_space<vmem>>, vector<128x32xf32>
    %c0_1 = arith.constant 0 : index
    %c0_2 = arith.constant 0 : index
    %1 = vector.load %arg1[%c0_1, %c0_2] : memref<1024x32xf32, #tpu.memory_space<vmem>>, vector<1024x32xf32>
    %cst = arith.constant dense<0.000000e+00> : vector<128x1024xf32>
    %2 = tpu.matmul %0, %1, %cst {dimension_numbers = #tpu.dot_dimension_numbers<[1], [1], [0], [0], [0, 0, 1, 0], [], []>} : vector<128x32xf32>, vector<1024x32xf32>, vector<128x1024xf32> -> vector<128x1024xf32>
    %c0_3 = arith.constant 0 : index
    %c0_4 = arith.constant 0 : index
    %3 = vector.load %arg3[%c0_3, %c0_4] : memref<128x1xf32, #tpu.memory_space<vmem>>, vector<128x1xf32>
    %4 = vector.broadcast %3 : vector<128x1xf32> to vector<128x1024xf32>
    %5 = arith.addf %2, %4 : vector<128x1024xf32>
    %cst_5 = arith.constant 0.000000e+00 : f32
    %6 = vector.broadcast %cst_5 : f32 to vector<128x1024xf32>
    %7 = arith.maximumf %5, %6 : vector<128x1024xf32>
    %c0_6 = arith.constant 0 : index
    %c0_7 = arith.constant 0 : index
    %8 = vector.load %arg4[%c0_6, %c0_7] : memref<1x128xf32, #tpu.memory_space<vmem>>, vector<1x128xf32>
    %cst_8 = arith.constant dense<0.000000e+00> : vector<1x1024xf32>
    %9 = tpu.matmul %8, %7, %cst_8 {dimension_numbers = #tpu.dot_dimension_numbers<[1], [0], [0], [1], [0, 0, 1, 1], [], []>} : vector<1x128xf32>, vector<128x1024xf32>, vector<1x1024xf32> -> vector<1x1024xf32>
    %c0_9 = arith.constant 0 : index
    %c0_10 = arith.constant 0 : index
    %10 = vector.load %arg5[%c0_9, %c0_10] : memref<1x1xf32, #tpu.memory_space<vmem>>, vector<1x1xf32>
    %11 = vector.broadcast %10 : vector<1x1xf32> to vector<1x1024xf32>
    %12 = arith.addf %9, %11 : vector<1x1024xf32>
    %c0_11 = arith.constant 0 : index
    %c0_12 = arith.constant 0 : index
    %13 = vector.load %arg6[%c0_11, %c0_12] : memref<1x1024xf32, #tpu.memory_space<vmem>>, vector<1x1024xf32>
    tpu.vector_store %arg6[%c0_11, %c0_12], %12 {strides = array<i32>} : memref<1x1024xf32, #tpu.memory_space<vmem>>, vector<1x1024xf32>,
    return
  }
  func.func @transform_0(%arg0: i32) -> (i32, i32) {
    %c0_i32 = arith.constant 0 : i32
    %c0_i32_0 = arith.constant 0 : i32
    return %arg0, %c0_i32 : i32, i32
  }
  func.func @transform_1(%arg0: i32) -> (i32, i32) {
    %c0_i32 = arith.constant 0 : i32
    %c0_i32_0 = arith.constant 0 : i32
    %c0_i32_1 = arith.constant 0 : i32
    return %c0_i32, %c0_i32_0 : i32, i32
  }
  func.func @transform_2(%arg0: i32) -> (i32, i32) {
    %c0_i32 = arith.constant 0 : i32
    %c0_i32_0 = arith.constant 0 : i32
    %c0_i32_1 = arith.constant 0 : i32
    return %c0_i32, %c0_i32_0 : i32, i32
  }
  func.func @transform_3(%arg0: i32) -> (i32, i32) {
    %c0_i32 = arith.constant 0 : i32
    %c0_i32_0 = arith.constant 0 : i32
    %c0_i32_1 = arith.constant 0 : i32
    return %c0_i32, %c0_i32_0 : i32, i32
  }
  func.func @transform_4(%arg0: i32) -> (i32, i32) {
    %c0_i32 = arith.constant 0 : i32
    %c0_i32_0 = arith.constant 0 : i32
    %c0_i32_1 = arith.constant 0 : i32
    return %c0_i32, %c0_i32_0 : i32, i32
  }
  func.func @transform_5(%arg0: i32) -> (i32, i32) {
    %c0_i32 = arith.constant 0 : i32
    %c0_i32_0 = arith.constant 0 : i32
    return %c0_i32, %arg0 : i32, i32
  }
}

</mosaic_0001>

<llo_original>
// kernel: tpu_custom_call.1
$region0: #{tpu_custom_call.1}
  #allocation0 [shape = 'u32[]', space=smem, size = 0x4, offset = 0x4, fixed_abs, tag = 'smem constant byte address 0x4 - core index']
  #allocation1 [shape = 'u32[144,128]{1,0:T(1,128)}', space=vmem, size = 0x12000, scoped, tag = 'internal scratch']
  #allocation2 [shape = 'f32[1,1]{1,0:T(1,128)S(1)}', space=vmem, size = 0x200, scoped, tag = 'scoped memory for tpu_custom_call.1']
  %s0 = inlined_call_operand.vmem [shape: f32[4196,32], index: 0, kind: input, shape index: {}]
  %s1 = inlined_call_operand.vmem [shape: f32[128,32], index: 1, kind: input, shape index: {}]
  %s2 = inlined_call_operand.vmem [shape: f32[128,1], index: 2, kind: input, shape index: {}]
  %s3 = inlined_call_operand.vmem [shape: f32[1,128], index: 3, kind: input, shape index: {}]
  %s4 = inlined_call_operand.<no memory space> [shape: f32[1,1], index: 4, kind: input, shape index: {}]
  %s5 = inlined_call_operand.hbm [shape: f32[1,4196], index: 5, kind: output, shape index: {}]
  %s6 = sld [smem:[#allocation0]]
  $region53: #{tpu_custom_call.1} parent=0
    _
  %s8 = ssub.s32 1, %s6
  %s9 = scalar_select 0, %s8, %s6
  %v10 = vstv %s4
  %11 = vst [vmem:[#allocation2] sm:$0x1] %v10
  $region1: #{tpu_custom_call.1} parent=0
    #allocation3 [shape = 'u8[8192]{0}', space=vmem, size = 0x2000, scoped, tag = 'output window, operand 0']
    #allocation4 [shape = 's32[2]{0}', space=sflag, size = 0x8, scoped, tag = 'scoped memory for tpu_custom_call.1']
    %12 = vsyncpa [#allocation4], 0
    %s13 = scalar_lea.sflag [#allocation4], 1
    %14 = vsyncpa %s13, 0
    loop: start=0, step=1, limit=7
    $region2: #{tpu_custom_call.1} parent=1 // loop_pre_header
      _
    $region3: #{tpu_custom_call.1} parent=1 // loop_header
      %s16 = sphi 0, %s20
      %p17 = scmp.ge.s32.totalorder %s16, 7
      %s26 = sphi 0, %s28
      %s29 = sphi 0, %s26
      %s30 = sphi 0, %s29
      %s46 = sphi 0, %s30
      %s50 = sphi 0, %s50
      %s52 = sphi 0, %s50
      %s53 = sphi 0, %s52
      %s67 = sphi 0, %s53
      %s71 = sphi 0, %s71
      %s73 = sphi 0, %s71
      %s74 = sphi 0, %s73
      %s88 = sphi 0, %s74
      %s92 = sphi 0, %s92
      %s94 = sphi 0, %s92
      %s95 = sphi 0, %s94
      %s109 = sphi 0, %s95
      %s113 = sphi 0, %s113
      %s115 = sphi 0, %s113
      %s116 = sphi 0, %s115
      %s130 = sphi 0, %s116
      %s136 = sphi 0, %s138
      %s139 = sphi 0, %s136
      %s140 = sphi 0, %s139
      %s156 = sphi 0, %s140
    $region4: #{tpu_custom_call.1} parent=1 // loop_header_branch
      %19 = sbr.rel (%p17) target = $region8
    $region5: #{tpu_custom_call.1} parent=1 // loop_body
      %s21 = ssub.s32 %s16, 1
      %s22 = ssub.s32 %s16, 2
      %s23 = sadd.s32 %s16, 1
      %s24 = ssub.s32 %s16, %s23
      %p25 = scmp.eq.s32.totalorder %s24, 0
      %s27 = sadd.s32 %s26, 1
      %s28 = scalar_select %p25, %s26, %s27
      %p31 = pneg %p25
      %p32 = scmp.eq.s32.totalorder %s16, 4
      %p33 = por %p31, %p32
      %p34 = scmp.ne.s32.totalorder %s26, %s29
      %p35 = scmp.eq.s32.totalorder %s16, 0
      %p36 = por %p34, %p35
      %p37 = scmp.ne.s32.totalorder %s26, %s29
      %p38 = scmp.eq.s32.totalorder %s21, 4
      %p39 = por %p37, %p38
      %p40 = scmp.ne.s32.totalorder %s29, %s30
      %p41 = scmp.eq.s32.totalorder %s21, 0
      %p42 = por %p40, %p41
      %p43 = scmp.ne.s32.totalorder %s29, %s30
      %p44 = scmp.eq.s32.totalorder %s22, 4
      %p45 = por %p43, %p44
      %p47 = scmp.ne.s32.totalorder %s30, %s46
      %p48 = scmp.eq.s32.totalorder %s22, 0
      %p49 = por %p47, %p48
      %s51 = sadd.s32 %s50, 1
      %p54 = scmp.eq.s32.totalorder %s16, 4
      %p55 = scmp.ne.s32.totalorder %s50, %s52
      %p56 = scmp.eq.s32.totalorder %s16, 0
      %p57 = por %p55, %p56
      %p58 = scmp.ne.s32.totalorder %s50, %s52
      %p59 = scmp.eq.s32.totalorder %s21, 4
      %p60 = por %p58, %p59
      %p61 = scmp.ne.s32.totalorder %s52, %s53
      %p62 = scmp.eq.s32.totalorder %s21, 0
      %p63 = por %p61, %p62
      %p64 = scmp.ne.s32.totalorder %s52, %s53
      %p65 = scmp.eq.s32.totalorder %s22, 4
      %p66 = por %p64, %p65
      %p68 = scmp.ne.s32.totalorder %s53, %s67
      %p69 = scmp.eq.s32.totalorder %s22, 0
      %p70 = por %p68, %p69
      %s72 = sadd.s32 %s71, 1
      %p75 = scmp.eq.s32.totalorder %s16, 4
      %p76 = scmp.ne.s32.totalorder %s71, %s73
      %p77 = scmp.eq.s32.totalorder %s16, 0
      %p78 = por %p76, %p77
      %p79 = scmp.ne.s32.totalorder %s71, %s73
      %p80 = scmp.eq.s32.totalorder %s21, 4
      %p81 = por %p79, %p80
      %p82 = scmp.ne.s32.totalorder %s73, %s74
      %p83 = scmp.eq.s32.totalorder %s21, 0
      %p84 = por %p82, %p83
      %p85 = scmp.ne.s32.totalorder %s73, %s74
      %p86 = scmp.eq.s32.totalorder %s22, 4
      %p87 = por %p85, %p86
      %p89 = scmp.ne.s32.totalorder %s74, %s88
      %p90 = scmp.eq.s32.totalorder %s22, 0
      %p91 = por %p89, %p90
      %s93 = sadd.s32 %s92, 1
      %p96 = scmp.eq.s32.totalorder %s16, 4
      %p97 = scmp.ne.s32.totalorder %s92, %s94
      %p98 = scmp.eq.s32.totalorder %s16, 0
      %p99 = por %p97, %p98
      %p100 = scmp.ne.s32.totalorder %s92, %s94
      %p101 = scmp.eq.s32.totalorder %s21, 4
      %p102 = por %p100, %p101
      %p103 = scmp.ne.s32.totalorder %s94, %s95
      %p104 = scmp.eq.s32.totalorder %s21, 0
      %p105 = por %p103, %p104
      %p106 = scmp.ne.s32.totalorder %s94, %s95
      %p107 = scmp.eq.s32.totalorder %s22, 4
      %p108 = por %p106, %p107
      %p110 = scmp.ne.s32.totalorder %s95, %s109
      %p111 = scmp.eq.s32.totalorder %s22, 0
      %p112 = por %p110, %p111
      %s114 = sadd.s32 %s113, 1
      %p117 = scmp.eq.s32.totalorder %s16, 4
      %p118 = scmp.ne.s32.totalorder %s113, %s115
      %p119 = scmp.eq.s32.totalorder %s16, 0
      %p120 = por %p118, %p119
      %p121 = scmp.ne.s32.totalorder %s113, %s115
      %p122 = scmp.eq.s32.totalorder %s21, 4
      %p123 = por %p121, %p122
      %p124 = scmp.ne.s32.totalorder %s115, %s116
      %p125 = scmp.eq.s32.totalorder %s21, 0
      %p126 = por %p124, %p125
      %p127 = scmp.ne.s32.totalorder %s115, %s116
      %p128 = scmp.eq.s32.totalorder %s22, 4
      %p129 = por %p127, %p128
      %p131 = scmp.ne.s32.totalorder %s116, %s130
      %p132 = scmp.eq.s32.totalorder %s22, 0
      %p133 = por %p131, %p132
      %s134 = ssub.s32 %s16, %s23
      %p135 = scmp.eq.s32.totalorder %s134, 0
      %s137 = sadd.s32 %s136, 1
      %s138 = scalar_select %p135, %s136, %s137
      %p141 = pneg %p135
      %p142 = scmp.eq.s32.totalorder %s16, 4
      %p143 = por %p141, %p142
      %p144 = scmp.ne.s32.totalorder %s136, %s139
      %p145 = scmp.eq.s32.totalorder %s16, 0
      %p146 = por %p144, %p145
      %p147 = scmp.ne.s32.totalorder %s136, %s139
      %p148 = scmp.eq.s32.totalorder %s21, 4
      %p149 = por %p147, %p148
      %p150 = scmp.ne.s32.totalorder %s139, %s140
      %p151 = scmp.eq.s32.totalorder %s21, 0
      %p152 = por %p150, %p151
      %p153 = scmp.ne.s32.totalorder %s139, %s140
      %p154 = scmp.eq.s32.totalorder %s22, 4
      %p155 = por %p153, %p154
      %p157 = scmp.ne.s32.totalorder %s140, %s156
      %p158 = scmp.eq.s32.totalorder %s22, 0
      %p159 = por %p157, %p158
      %p160 = scmp.le.s32.totalorder 1, %s16
      %p161 = scmp.lt.s32.totalorder %s16, 6
      %p162 = pnand %p160, %p161
      %p163 = pneg %p162
      // Predicated region
      $region9: #{tpu_custom_call.1} parent=5 // pred_check
        _
      $region10: #{tpu_custom_call.1} parent=5 // pred_check_branch
        %165 = sbr.rel (%p162) target = $region12
      $region11: #{tpu_custom_call.1} parent=5 // pred_region
        %s166 = ssub.s32 %s16, 1
        // Predicated region
        $region13: #{tpu_custom_call.1} parent=11 // pred_check
          %p167 = pneg %p63
        $region14: #{tpu_custom_call.1} parent=11 // pred_check_branch
          %169 = sbr.rel (%p167) target = $region16
        $region15: #{tpu_custom_call.1} parent=11 // pred_region
          _
        $region16: #{tpu_custom_call.1} parent=11 // pred_fallthru
          _
        // Predicated region
        $region17: #{tpu_custom_call.1} parent=11 // pred_check
          %p170 = pneg %p84
        $region18: #{tpu_custom_call.1} parent=11 // pred_check_branch
          %172 = sbr.rel (%p170) target = $region20
        $region19: #{tpu_custom_call.1} parent=11 // pred_region
          _
        $region20: #{tpu_custom_call.1} parent=11 // pred_fallthru
          _
        // Predicated region
        $region21: #{tpu_custom_call.1} parent=11 // pred_check
          %p173 = pneg %p105
        $region22: #{tpu_custom_call.1} parent=11 // pred_check_branch
          %175 = sbr.rel (%p173) target = $region24
        $region23: #{tpu_custom_call.1} parent=11 // pred_region
          _
        $region24: #{tpu_custom_call.1} parent=11 // pred_fallthru
          _
        // Predicated region
        $region25: #{tpu_custom_call.1} parent=11 // pred_check
          %p176 = pneg %p126
        $region26: #{tpu_custom_call.1} parent=11 // pred_check_branch
          %178 = sbr.rel (%p176) target = $region28
        $region27: #{tpu_custom_call.1} parent=11 // pred_region
          _
        $region28: #{tpu_custom_call.1} parent=11 // pred_fallthru
          _
      $region12: #{tpu_custom_call.1} parent=5 // pred_fallthru
        _
      %p179 = scmp.lt.s32.totalorder %s16, 5
      // Predicated region
      $region29: #{tpu_custom_call.1} parent=5 // pred_check
        %p180 = pneg %p179
      $region30: #{tpu_custom_call.1} parent=5 // pred_check_branch
        %182 = sbr.rel (%p180) target = $region32
      $region31: #{tpu_custom_call.1} parent=5 // pred_region
        // Predicated region
        $region33: #{tpu_custom_call.1} parent=31 // pred_check
          %p183 = pneg %p36
        $region34: #{tpu_custom_call.1} parent=31 // pred_check_branch
          %185 = sbr.rel (%p183) target = $region36
        $region35: #{tpu_custom_call.1} parent=31 // pred_region
          %s186 = smul.u32 128, %s16
          %s187 = ssub.s32 525, %s186
          %p188 = scmp.lt.s32.totalorder %s187, 128
          %s189 = scalar_select %p188, %s187, 128
          %s190 = smul.u32 128, %s189
          %p191 = scmp.lt.s32.totalorder %s186, 524
          %s192 = scalar_select %p191, %s186, 524
          %s193 = smul.addr %s192, 8
          %s194 = scalar_lea.vmem %s0, %s193
          %s195 = smul.u32 128, %s16
          %s196 = ssub.s32 525, %s195
          %p197 = scmp.lt.s32.totalorder %s196, 128
          %s198 = scalar_select %p197, %s196, 128
          %s199 = smul.u32 128, %s198
        $region36: #{tpu_custom_call.1} parent=31 // pred_fallthru
          _
      $region32: #{tpu_custom_call.1} parent=5 // pred_fallthru
        _
      %p200 = scmp.le.s32.totalorder 1, %s16
      %p201 = scmp.lt.s32.totalorder %s16, 6
      %p202 = pnand %p200, %p201
      %p203 = pneg %p202
      // Predicated region
      $region37: #{tpu_custom_call.1} parent=5 // pred_check
        _
      $region38: #{tpu_custom_call.1} parent=5 // pred_check_branch
        %205 = sbr.rel (%p202) target = $region40
      $region39: #{tpu_custom_call.1} parent=5 // pred_region
        %s206 = ssub.s32 %s16, 1
        %s207 = smul.u32 128, %s21
        %s208 = ssub.s32 525, %s207
        %p209 = scmp.lt.s32.totalorder %s208, 128
        %s210 = scalar_select %p209, %s208, 128
        %s211 = smul.u32 128, %s210
        %p212 = scmp.lt.s32.totalorder %s207, 524
        %s213 = scalar_select %p212, %s207, 524
        %s214 = smul.addr %s213, 8
        %s215 = scalar_lea.vmem %s0, %s214
        %p216 = pneg %p42
        %p217 = pneg %p39
        %p218 = pneg %p63
        %p219 = pneg %p60
        %p220 = pneg %p84
        %p221 = pneg %p81
        %p222 = pneg %p105
        %p223 = pneg %p102
        %p224 = pneg %p126
        %p225 = pneg %p123
        %p226 = pneg %p152
        %p227 = pneg %p149
        %s228 = sand.u32 %s139, 1
        %s229 = scalar_lea.sflag [#allocation4], %s228
        %s230 = sand.u32 %s139, 1
        %s231 = smul.addr %s230, 8
        %s232 = scalar_lea.vmem [#allocation3], %s231
        %s233 = smul.u32 128, %s21
        %s234 = ssub.s32 525, %s233
        %p235 = scmp.lt.s32.totalorder %s234, 128
        %s236 = scalar_select %p235, %s234, 128
        %s237 = smul.u32 128, %s236
        %p238 = scmp.lt.s32.totalorder %s233, 524
        %s239 = scalar_select %p238, %s233, 524
        %s240 = smul.addr %s239, 8
        %s241 = scalar_lea.vmem %s0, %s240
        %s242 = smul.u32 128, %s21
        %s243 = ssub.s32 525, %s242
        %p244 = scmp.lt.s32.totalorder %s243, 128
        %s245 = scalar_select %p244, %s243, 128
        %s246 = smul.u32 128, %s245
        %s247 = smul.u32 8, %s21
        %s248 = ssub.s32 33, %s247
        %p249 = scmp.lt.s32.totalorder %s248, 8
        %s250 = scalar_select %p249, %s248, 8
        %s251 = smul.u32 16, %s250
        %v252 = vld [vmem:[%s1] sm:$0xff]
        %v253 = vld [vmem:[%s1 + $0x8] sm:$0xff]
        %v254 = vld [vmem:[%s1 + $0x10] sm:$0xff]
        %v255 = vld [vmem:[%s1 + $0x18] sm:$0xff]
        %v256 = vld [vmem:[%s1 + $0x20] sm:$0xff]
        %v257 = vld [vmem:[%s1 + $0x28] sm:$0xff]
        %v258 = vld [vmem:[%s1 + $0x30] sm:$0xff]
        %v259 = vld [vmem:[%s1 + $0x38] sm:$0xff]
        %v260 = vld [vmem:[%s1 + $0x40] sm:$0xff]
        %v261 = vld [vmem:[%s1 + $0x48] sm:$0xff]
        %v262 = vld [vmem:[%s1 + $0x50] sm:$0xff]
        %v263 = vld [vmem:[%s1 + $0x58] sm:$0xff]
        %v264 = vld [vmem:[%s1 + $0x60] sm:$0xff]
        %v265 = vld [vmem:[%s1 + $0x68] sm:$0xff]
        %v266 = vld [vmem:[%s1 + $0x70] sm:$0xff]
        %v267 = vld [vmem:[%s1 + $0x78] sm:$0xff]
        %v268 = vld [vmem:[%s241] sm:$0xff]
        %v269 = vld [vmem:[%s241 + $0x8] sm:$0xff]
        %v270 = vld [vmem:[%s241 + $0x10] sm:$0xff]
        %v271 = vld [vmem:[%s241 + $0x18] sm:$0xff]
        %v272 = vld [vmem:[%s241 + $0x20] sm:$0xff]
        %v273 = vld [vmem:[%s241 + $0x28] sm:$0xff]
        %v274 = vld [vmem:[%s241 + $0x30] sm:$0xff]
        %v275 = vld [vmem:[%s241 + $0x38] sm:$0xff]
        %v276 = vld [vmem:[%s241 + $0x40] sm:$0xff]
        %v277 = vld [vmem:[%s241 + $0x48] sm:$0xff]
        %v278 = vld [vmem:[%s241 + $0x50] sm:$0xff]
        %v279 = vld [vmem:[%s241 + $0x58] sm:$0xff]
        %v280 = vld [vmem:[%s241 + $0x60] sm:$0xff]
        %v281 = vld [vmem:[%s241 + $0x68] sm:$0xff]
        %v282 = vld [vmem:[%s241 + $0x70] sm:$0xff]
        %v283 = vld [vmem:[%s241 + $0x78] sm:$0xff]
        %v284 = vld [vmem:[%s241 + $0x80] sm:$0xff]
        %v285 = vld [vmem:[%s241 + $0x88] sm:$0xff]
        %v286 = vld [vmem:[%s241 + $0x90] sm:$0xff]
        %v287 = vld [vmem:[%s241 + $0x98] sm:$0xff]
        %v288 = vld [vmem:[%s241 + $0xa0] sm:$0xff]
        %v289 = vld [vmem:[%s241 + $0xa8] sm:$0xff]
        %v290 = vld [vmem:[%s241 + $0xb0] sm:$0xff]
        %v291 = vld [vmem:[%s241 + $0xb8] sm:$0xff]
        %v292 = vld [vmem:[%s241 + $0xc0] sm:$0xff]
        %v293 = vld [vmem:[%s241 + $0xc8] sm:$0xff]
        %v294 = vld [vmem:[%s241 + $0xd0] sm:$0xff]
        %v295 = vld [vmem:[%s241 + $0xd8] sm:$0xff]
        %v296 = vld [vmem:[%s241 + $0xe0] sm:$0xff]
        %v297 = vld [vmem:[%s241 + $0xe8] sm:$0xff]
        %v298 = vld [vmem:[%s241 + $0xf0] sm:$0xff]
        %v299 = vld [vmem:[%s241 + $0xf8] sm:$0xff]
        %v300 = vld [vmem:[%s241 + $0x100] sm:$0xff]
        %v301 = vld [vmem:[%s241 + $0x108] sm:$0xff]
        %v302 = vld [vmem:[%s241 + $0x110] sm:$0xff]
        %v303 = vld [vmem:[%s241 + $0x118] sm:$0xff]
        %v304 = vld [vmem:[%s241 + $0x120] sm:$0xff]
        %v305 = vld [vmem:[%s241 + $0x128] sm:$0xff]
        %v306 = vld [vmem:[%s241 + $0x130] sm:$0xff]
        %v307 = vld [vmem:[%s241 + $0x138] sm:$0xff]
        %v308 = vld [vmem:[%s241 + $0x140] sm:$0xff]
        %v309 = vld [vmem:[%s241 + $0x148] sm:$0xff]
        %v310 = vld [vmem:[%s241 + $0x150] sm:$0xff]
        %v311 = vld [vmem:[%s241 + $0x158] sm:$0xff]
        %v312 = vld [vmem:[%s241 + $0x160] sm:$0xff]
        %v313 = vld [vmem:[%s241 + $0x168] sm:$0xff]
        %v314 = vld [vmem:[%s241 + $0x170] sm:$0xff]
        %v315 = vld [vmem:[%s241 + $0x178] sm:$0xff]
        %v316 = vld [vmem:[%s241 + $0x180] sm:$0xff]
        %v317 = vld [vmem:[%s241 + $0x188] sm:$0xff]
        %v318 = vld [vmem:[%s241 + $0x190] sm:$0xff]
        %v319 = vld [vmem:[%s241 + $0x198] sm:$0xff]
        %v320 = vld [vmem:[%s241 + $0x1a0] sm:$0xff]
        %v321 = vld [vmem:[%s241 + $0x1a8] sm:$0xff]
        %v322 = vld [vmem:[%s241 + $0x1b0] sm:$0xff]
        %v323 = vld [vmem:[%s241 + $0x1b8] sm:$0xff]
        %v324 = vld [vmem:[%s241 + $0x1c0] sm:$0xff]
        %v325 = vld [vmem:[%s241 + $0x1c8] sm:$0xff]
        %v326 = vld [vmem:[%s241 + $0x1d0] sm:$0xff]
        %v327 = vld [vmem:[%s241 + $0x1d8] sm:$0xff]
        %v328 = vld [vmem:[%s241 + $0x1e0] sm:$0xff]
        %v329 = vld [vmem:[%s241 + $0x1e8] sm:$0xff]
        %v330 = vld [vmem:[%s241 + $0x1f0] sm:$0xff]
        %v331 = vld [vmem:[%s241 + $0x1f8] sm:$0xff]
        %v332 = vld [vmem:[%s241 + $0x200] sm:$0xff]
        %v333 = vld [vmem:[%s241 + $0x208] sm:$0xff]
        %v334 = vld [vmem:[%s241 + $0x210] sm:$0xff]
        %v335 = vld [vmem:[%s241 + $0x218] sm:$0xff]
        %v336 = vld [vmem:[%s241 + $0x220] sm:$0xff]
        %v337 = vld [vmem:[%s241 + $0x228] sm:$0xff]
        %v338 = vld [vmem:[%s241 + $0x230] sm:$0xff]
        %v339 = vld [vmem:[%s241 + $0x238] sm:$0xff]
        %v340 = vld [vmem:[%s241 + $0x240] sm:$0xff]
        %v341 = vld [vmem:[%s241 + $0x248] sm:$0xff]
        %v342 = vld [vmem:[%s241 + $0x250] sm:$0xff]
        %v343 = vld [vmem:[%s241 + $0x258] sm:$0xff]
        %v344 = vld [vmem:[%s241 + $0x260] sm:$0xff]
        %v345 = vld [vmem:[%s241 + $0x268] sm:$0xff]
        %v346 = vld [vmem:[%s241 + $0x270] sm:$0xff]
        %v347 = vld [vmem:[%s241 + $0x278] sm:$0xff]
        %v348 = vld [vmem:[%s241 + $0x280] sm:$0xff]
        %v349 = vld [vmem:[%s241 + $0x288] sm:$0xff]
        %v350 = vld [vmem:[%s241 + $0x290] sm:$0xff]
        %v351 = vld [vmem:[%s241 + $0x298] sm:$0xff]
        %v352 = vld [vmem:[%s241 + $0x2a0] sm:$0xff]
        %v353 = vld [vmem:[%s241 + $0x2a8] sm:$0xff]
        %v354 = vld [vmem:[%s241 + $0x2b0] sm:$0xff]
        %v355 = vld [vmem:[%s241 + $0x2b8] sm:$0xff]
        %v356 = vld [vmem:[%s241 + $0x2c0] sm:$0xff]
        %v357 = vld [vmem:[%s241 + $0x2c8] sm:$0xff]
        %v358 = vld [vmem:[%s241 + $0x2d0] sm:$0xff]
        %v359 = vld [vmem:[%s241 + $0x2d8] sm:$0xff]
        %v360 = vld [vmem:[%s241 + $0x2e0] sm:$0xff]
        %v361 = vld [vmem:[%s241 + $0x2e8] sm:$0xff]
        %v362 = vld [vmem:[%s241 + $0x2f0] sm:$0xff]
        %v363 = vld [vmem:[%s241 + $0x2f8] sm:$0xff]
        %v364 = vld [vmem:[%s241 + $0x300] sm:$0xff]
        %v365 = vld [vmem:[%s241 + $0x308] sm:$0xff]
        %v366 = vld [vmem:[%s241 + $0x310] sm:$0xff]
        %v367 = vld [vmem:[%s241 + $0x318] sm:$0xff]
        %v368 = vld [vmem:[%s241 + $0x320] sm:$0xff]
        %v369 = vld [vmem:[%s241 + $0x328] sm:$0xff]
        %v370 = vld [vmem:[%s241 + $0x330] sm:$0xff]
        %v371 = vld [vmem:[%s241 + $0x338] sm:$0xff]
        %v372 = vld [vmem:[%s241 + $0x340] sm:$0xff]
        %v373 = vld [vmem:[%s241 + $0x348] sm:$0xff]
        %v374 = vld [vmem:[%s241 + $0x350] sm:$0xff]
        %v375 = vld [vmem:[%s241 + $0x358] sm:$0xff]
        %v376 = vld [vmem:[%s241 + $0x360] sm:$0xff]
        %v377 = vld [vmem:[%s241 + $0x368] sm:$0xff]
        %v378 = vld [vmem:[%s241 + $0x370] sm:$0xff]
        %v379 = vld [vmem:[%s241 + $0x378] sm:$0xff]
        %v380 = vld [vmem:[%s241 + $0x380] sm:$0xff]
        %v381 = vld [vmem:[%s241 + $0x388] sm:$0xff]
        %v382 = vld [vmem:[%s241 + $0x390] sm:$0xff]
        %v383 = vld [vmem:[%s241 + $0x398] sm:$0xff]
        %v384 = vld [vmem:[%s241 + $0x3a0] sm:$0xff]
        %v385 = vld [vmem:[%s241 + $0x3a8] sm:$0xff]
        %v386 = vld [vmem:[%s241 + $0x3b0] sm:$0xff]
        %v387 = vld [vmem:[%s241 + $0x3b8] sm:$0xff]
        %v388 = vld [vmem:[%s241 + $0x3c0] sm:$0xff]
        %v389 = vld [vmem:[%s241 + $0x3c8] sm:$0xff]
        %v390 = vld [vmem:[%s241 + $0x3d0] sm:$0xff]
        %v391 = vld [vmem:[%s241 + $0x3d8] sm:$0xff]
        %v392 = vld [vmem:[%s241 + $0x3e0] sm:$0xff]
        %v393 = vld [vmem:[%s241 + $0x3e8] sm:$0xff]
        %v394 = vld [vmem:[%s241 + $0x3f0] sm:$0xff]
        %v395 = vld [vmem:[%s241 + $0x3f8] sm:$0xff]
        %v396 = vld [vmem:[%s2] sm:$0xff]
        %v397 = vld [vmem:[%s2 + $0x8] sm:$0xff]
        %v398 = vld [vmem:[%s2 + $0x10] sm:$0xff]
        %v399 = vld [vmem:[%s2 + $0x18] sm:$0xff]
        %v400 = vld [vmem:[%s2 + $0x20] sm:$0xff]
        %v401 = vld [vmem:[%s2 + $0x28] sm:$0xff]
        %v402 = vld [vmem:[%s2 + $0x30] sm:$0xff]
        %v403 = vld [vmem:[%s2 + $0x38] sm:$0xff]
        %v404 = vld [vmem:[%s2 + $0x40] sm:$0xff]
        %v405 = vld [vmem:[%s2 + $0x48] sm:$0xff]
        %v406 = vld [vmem:[%s2 + $0x50] sm:$0xff]
        %v407 = vld [vmem:[%s2 + $0x58] sm:$0xff]
        %v408 = vld [vmem:[%s2 + $0x60] sm:$0xff]
        %v409 = vld [vmem:[%s2 + $0x68] sm:$0xff]
        %v410 = vld [vmem:[%s2 + $0x70] sm:$0xff]
        %v411 = vld [vmem:[%s2 + $0x78] sm:$0xff]
        %413 = vset.pattern.permute.xlu0 0
        %414 = vperm.xlu0 %413, %v396
        %v415 = vpop.permute.xlu0 %414
        %418 = vset.pattern.permute.xlu0 0
        %419 = vperm.xlu0 %418, %v397
        %v420 = vpop.permute.xlu0 %419
        %423 = vset.pattern.permute.xlu0 0
        %424 = vperm.xlu0 %423, %v398
        %v425 = vpop.permute.xlu0 %424
        %428 = vset.pattern.permute.xlu0 0
        %429 = vperm.xlu0 %428, %v399
        %v430 = vpop.permute.xlu0 %429
        %433 = vset.pattern.permute.xlu0 0
        %434 = vperm.xlu0 %433, %v400
        %v435 = vpop.permute.xlu0 %434
        %438 = vset.pattern.permute.xlu0 0
        %439 = vperm.xlu0 %438, %v401
        %v440 = vpop.permute.xlu0 %439
        %443 = vset.pattern.permute.xlu0 0
        %444 = vperm.xlu0 %443, %v402
        %v445 = vpop.permute.xlu0 %444
        %448 = vset.pattern.permute.xlu0 0
        %449 = vperm.xlu0 %448, %v403
        %v450 = vpop.permute.xlu0 %449
        %453 = vset.pattern.permute.xlu0 0
        %454 = vperm.xlu0 %453, %v404
        %v455 = vpop.permute.xlu0 %454
        %458 = vset.pattern.permute.xlu0 0
        %459 = vperm.xlu0 %458, %v405
        %v460 = vpop.permute.xlu0 %459
        %463 = vset.pattern.permute.xlu0 0
        %464 = vperm.xlu0 %463, %v406
        %v465 = vpop.permute.xlu0 %464
        %468 = vset.pattern.permute.xlu0 0
        %469 = vperm.xlu0 %468, %v407
        %v470 = vpop.permute.xlu0 %469
        %473 = vset.pattern.permute.xlu0 0
        %474 = vperm.xlu0 %473, %v408
        %v475 = vpop.permute.xlu0 %474
        %478 = vset.pattern.permute.xlu0 0
        %479 = vperm.xlu0 %478, %v409
        %v480 = vpop.permute.xlu0 %479
        %483 = vset.pattern.permute.xlu0 0
        %484 = vperm.xlu0 %483, %v410
        %v485 = vpop.permute.xlu0 %484
        %488 = vset.pattern.permute.xlu0 0
        %489 = vperm.xlu0 %488, %v411
        %v490 = vpop.permute.xlu0 %489
        %vm492 = vcmask 261120
        %v494 = vsel %vm492, %v252, 0
        %v497 = vsel %vm492, %v253, 0
        %v500 = vsel %vm492, %v254, 0
        %v503 = vsel %vm492, %v255, 0
        %v506 = vsel %vm492, %v256, 0
        %v509 = vsel %vm492, %v257, 0
        %v512 = vsel %vm492, %v258, 0
        %v515 = vsel %vm492, %v259, 0
        %v518 = vsel %vm492, %v260, 0
        %v521 = vsel %vm492, %v261, 0
        %v524 = vsel %vm492, %v262, 0
        %v527 = vsel %vm492, %v263, 0
        %v530 = vsel %vm492, %v264, 0
        %v533 = vsel %vm492, %v265, 0
        %v536 = vsel %vm492, %v266, 0
        %v539 = vsel %vm492, %v267, 0
        %v542 = vsel %vm492, %v268, 0
        %v545 = vsel %vm492, %v269, 0
        %v548 = vsel %vm492, %v270, 0
        %v551 = vsel %vm492, %v271, 0
        %v554 = vsel %vm492, %v272, 0
        %v557 = vsel %vm492, %v273, 0
        %v560 = vsel %vm492, %v274, 0
        %v563 = vsel %vm492, %v275, 0
        %v566 = vsel %vm492, %v276, 0
        %v569 = vsel %vm492, %v277, 0
        %v572 = vsel %vm492, %v278, 0
        %v575 = vsel %vm492, %v279, 0
        %v578 = vsel %vm492, %v280, 0
        %v581 = vsel %vm492, %v281, 0
        %v584 = vsel %vm492, %v282, 0
        %v587 = vsel %vm492, %v283, 0
        %v590 = vsel %vm492, %v284, 0
        %v593 = vsel %vm492, %v285, 0
        %v596 = vsel %vm492, %v286, 0
        %v599 = vsel %vm492, %v287, 0
        %v602 = vsel %vm492, %v288, 0
        %v605 = vsel %vm492, %v289, 0
        %v608 = vsel %vm492, %v290, 0
        %v611 = vsel %vm492, %v291, 0
        %v614 = vsel %vm492, %v292, 0
        %v617 = vsel %vm492, %v293, 0
        %v620 = vsel %vm492, %v294, 0
        %v623 = vsel %vm492, %v295, 0
        %v626 = vsel %vm492, %v296, 0
        %v629 = vsel %vm492, %v297, 0
        %v632 = vsel %vm492, %v298, 0
        %v635 = vsel %vm492, %v299, 0
        %v638 = vsel %vm492, %v300, 0
        %v641 = vsel %vm492, %v301, 0
        %v644 = vsel %vm492, %v302, 0
        %v647 = vsel %vm492, %v303, 0
        %v650 = vsel %vm492, %v304, 0
        %v653 = vsel %vm492, %v305, 0
        %v656 = vsel %vm492, %v306, 0
        %v659 = vsel %vm492, %v307, 0
        %v662 = vsel %vm492, %v308, 0
        %v665 = vsel %vm492, %v309, 0
        %v668 = vsel %vm492, %v310, 0
        %v671 = vsel %vm492, %v311, 0
        %v674 = vsel %vm492, %v312, 0
        %v677 = vsel %vm492, %v313, 0
        %v680 = vsel %vm492, %v314, 0
        %v683 = vsel %vm492, %v315, 0
        %v686 = vsel %vm492, %v316, 0
        %v689 = vsel %vm492, %v317, 0
        %v692 = vsel %vm492, %v318, 0
        %v695 = vsel %vm492, %v319, 0
        %v698 = vsel %vm492, %v320, 0
        %v701 = vsel %vm492, %v321, 0
        %v704 = vsel %vm492, %v322, 0
        %v707 = vsel %vm492, %v323, 0
        %v710 = vsel %vm492, %v324, 0
        %v713 = vsel %vm492, %v325, 0
        %v716 = vsel %vm492, %v326, 0
        %v719 = vsel %vm492, %v327, 0
        %v722 = vsel %vm492, %v328, 0
        %v725 = vsel %vm492, %v329, 0
        %v728 = vsel %vm492, %v330, 0
        %v731 = vsel %vm492, %v331, 0
        %v734 = vsel %vm492, %v332, 0
        %v737 = vsel %vm492, %v333, 0
        %v740 = vsel %vm492, %v334, 0
        %v743 = vsel %vm492, %v335, 0
        %v746 = vsel %vm492, %v336, 0
        %v749 = vsel %vm492, %v337, 0
        %v752 = vsel %vm492, %v338, 0
        %v755 = vsel %vm492, %v339, 0
        %v758 = vsel %vm492, %v340, 0
        %v761 = vsel %vm492, %v341, 0
        %v764 = vsel %vm492, %v342, 0
        %v767 = vsel %vm492, %v343, 0
        %v770 = vsel %vm492, %v344, 0
        %v773 = vsel %vm492, %v345, 0
        %v776 = vsel %vm492, %v346, 0
        %v779 = vsel %vm492, %v347, 0
        %v782 = vsel %vm492, %v348, 0
        %v785 = vsel %vm492, %v349, 0
        %v788 = vsel %vm492, %v350, 0
        %v791 = vsel %vm492, %v351, 0
        %v794 = vsel %vm492, %v352, 0
        %v797 = vsel %vm492, %v353, 0
        %v800 = vsel %vm492, %v354, 0
        %v803 = vsel %vm492, %v355, 0
        %v806 = vsel %vm492, %v356, 0
        %v809 = vsel %vm492, %v357, 0
        %v812 = vsel %vm492, %v358, 0
        %v815 = vsel %vm492, %v359, 0
        %v818 = vsel %vm492, %v360, 0
        %v821 = vsel %vm492, %v361, 0
        %v824 = vsel %vm492, %v362, 0
        %v827 = vsel %vm492, %v363, 0
        %v830 = vsel %vm492, %v364, 0
        %v833 = vsel %vm492, %v365, 0
        %v836 = vsel %vm492, %v366, 0
        %v839 = vsel %vm492, %v367, 0
        %v842 = vsel %vm492, %v368, 0
        %v845 = vsel %vm492, %v369, 0
        %v848 = vsel %vm492, %v370, 0
        %v851 = vsel %vm492, %v371, 0
        %v854 = vsel %vm492, %v372, 0
        %v857 = vsel %vm492, %v373, 0
        %v860 = vsel %vm492, %v374, 0
        %v863 = vsel %vm492, %v375, 0
        %v866 = vsel %vm492, %v376, 0
        %v869 = vsel %vm492, %v377, 0
        %v872 = vsel %vm492, %v378, 0
        %v875 = vsel %vm492, %v379, 0
        %v878 = vsel %vm492, %v380, 0
        %v881 = vsel %vm492, %v381, 0
        %v884 = vsel %vm492, %v382, 0
        %v887 = vsel %vm492, %v383, 0
        %v890 = vsel %vm492, %v384, 0
        %v893 = vsel %vm492, %v385, 0
        %v896 = vsel %vm492, %v386, 0
        %v899 = vsel %vm492, %v387, 0
        %v902 = vsel %vm492, %v388, 0
        %v905 = vsel %vm492, %v389, 0
        %v908 = vsel %vm492, %v390, 0
        %v911 = vsel %vm492, %v391, 0
        %v914 = vsel %vm492, %v392, 0
        %v917 = vsel %vm492, %v393, 0
        %v920 = vsel %vm492, %v394, 0
        %v923 = vsel %vm492, %v395, 0
        %925 = vmatprep.subr.mxu0 0.0
        %926 = vmatpush1.xpose.msra.mxu0 %v542
        %927 = vmatprep.subr.mxu0 0.0
        %928 = vmatpush1.xpose.msra.mxu0 %v545
        %929 = vmatprep.subr.mxu0 0.0
        %930 = vmatpush1.xpose.msra.mxu0 %v548
        %931 = vmatprep.subr.mxu0 0.0
        %932 = vmatpush1.xpose.msra.mxu0 %v551
        %933 = vmatprep.subr.mxu0 0.0
        %934 = vmatpush1.xpose.msra.mxu0 %v554
        %935 = vmatprep.subr.mxu0 0.0
        %936 = vmatpush1.xpose.msra.mxu0 %v557
        %937 = vmatprep.subr.mxu0 0.0
        %938 = vmatpush1.xpose.msra.mxu0 %v560
        %939 = vmatprep.subr.mxu0 0.0
        %940 = vmatpush1.xpose.msra.mxu0 %v563
        %941 = vmatprep.subr.mxu0 0.0
        %942 = vmatpush1.xpose.msra.mxu0 %v566
        %943 = vmatprep.subr.mxu0 0.0
        %944 = vmatpush1.xpose.msra.mxu0 %v569
        %945 = vmatprep.subr.mxu0 0.0
        %946 = vmatpush1.xpose.msra.mxu0 %v572
        %947 = vmatprep.subr.mxu0 0.0
        %948 = vmatpush1.xpose.msra.mxu0 %v575
        %949 = vmatprep.subr.mxu0 0.0
        %950 = vmatpush1.xpose.msra.mxu0 %v578
        %951 = vmatprep.subr.mxu0 0.0
        %952 = vmatpush1.xpose.msra.mxu0 %v581
        %953 = vmatprep.subr.mxu0 0.0
        %954 = vmatpush1.xpose.msra.mxu0 %v584
        %955 = vmatprep.subr.mxu0 0.0
        %956 = vmatpush1.xpose.msra.mxu0 %v587
        %957 = vmatprep.subr.mxu0 0.0
        %958 = vmatpush1.xpose.msra.mxu0 %v590
        %959 = vmatprep.subr.mxu0 0.0
        %960 = vmatpush1.xpose.msra.mxu0 %v593
        %961 = vmatprep.subr.mxu0 0.0
        %962 = vmatpush1.xpose.msra.mxu0 %v596
        %963 = vmatprep.subr.mxu0 0.0
        %964 = vmatpush1.xpose.msra.mxu0 %v599
        %965 = vmatprep.subr.mxu0 0.0
        %966 = vmatpush1.xpose.msra.mxu0 %v602
        %967 = vmatprep.subr.mxu0 0.0
        %968 = vmatpush1.xpose.msra.mxu0 %v605
        %969 = vmatprep.subr.mxu0 0.0
        %970 = vmatpush1.xpose.msra.mxu0 %v608
        %971 = vmatprep.subr.mxu0 0.0
        %972 = vmatpush1.xpose.msra.mxu0 %v611
        %973 = vmatprep.subr.mxu0 0.0
        %974 = vmatpush1.xpose.msra.mxu0 %v614
        %975 = vmatprep.subr.mxu0 0.0
        %976 = vmatpush1.xpose.msra.mxu0 %v617
        %977 = vmatprep.subr.mxu0 0.0
        %978 = vmatpush1.xpose.msra.mxu0 %v620
        %979 = vmatprep.subr.mxu0 0.0
        %980 = vmatpush1.xpose.msra.mxu0 %v623
        %981 = vmatprep.subr.mxu0 0.0
        %982 = vmatpush1.xpose.msra.mxu0 %v626
        %983 = vmatprep.subr.mxu0 0.0
        %984 = vmatpush1.xpose.msra.mxu0 %v629
        %985 = vmatprep.subr.mxu0 0.0
        %986 = vmatpush1.xpose.msra.mxu0 %v632
        %987 = vmatprep.subr.mxu0 0.0
        %988 = vmatpush1.xpose.msra.mxu0 %v635
        %989 = vmatprep.mubr.f32.mxu0 0.0
        %990 = vmatmul.mubr.f32.gmra.mrb[0].mxu0 %v494
        %v991 = vpop.f32.mrb[0].mxu0
        %v992 = vadd.f32 %v415, %v991
        %v993 = vpop.f32.mrb[0].mxu0
        %v994 = vadd.f32 %v415, %v993
        %995 = vmatprep.mubr.f32.mxu0 0.0
        %996 = vmatmul.mubr.f32.gmra.mrb[0].mxu0 %v497
        %v997 = vpop.f32.mrb[0].mxu0
        %v998 = vadd.f32 %v420, %v997
        %v999 = vpop.f32.mrb[0].mxu0
        %v1000 = vadd.f32 %v420, %v999
        %1001 = vmatprep.mubr.f32.mxu0 0.0
        %1002 = vmatmul.mubr.f32.gmra.mrb[0].mxu0 %v500
        %v1003 = vpop.f32.mrb[0].mxu0
        %v1004 = vadd.f32 %v425, %v1003
        %v1005 = vpop.f32.mrb[0].mxu0
        %v1006 = vadd.f32 %v425, %v1005
        %1007 = vmatprep.mubr.f32.mxu0 0.0
        %1008 = vmatmul.mubr.f32.gmra.mrb[0].mxu0 %v503
        %v1009 = vpop.f32.mrb[0].mxu0
        %v1010 = vadd.f32 %v430, %v1009
        %v1011 = vpop.f32.mrb[0].mxu0
        %v1012 = vadd.f32 %v430, %v1011
        %1013 = vmatprep.mubr.f32.mxu0 0.0
        %1014 = vmatmul.mubr.f32.gmra.mrb[0].mxu0 %v506
        %v1015 = vpop.f32.mrb[0].mxu0
        %v1016 = vadd.f32 %v435, %v1015
        %v1017 = vpop.f32.mrb[0].mxu0
        %v1018 = vadd.f32 %v435, %v1017
        %1019 = vmatprep.mubr.f32.mxu0 0.0
        %1020 = vmatmul.mubr.f32.gmra.mrb[0].mxu0 %v509
        %v1021 = vpop.f32.mrb[0].mxu0
        %v1022 = vadd.f32 %v440, %v1021
        %v1023 = vpop.f32.mrb[0].mxu0
        %v1024 = vadd.f32 %v440, %v1023
        %1025 = vmatprep.mubr.f32.mxu0 0.0
        %1026 = vmatmul.mubr.f32.gmra.mrb[0].mxu0 %v512
        %v1027 = vpop.f32.mrb[0].mxu0
        %v1028 = vadd.f32 %v445, %v1027
        %v1029 = vpop.f32.mrb[0].mxu0
        %v1030 = vadd.f32 %v445, %v1029
        %1031 = vmatprep.mubr.f32.mxu0 0.0
        %1032 = vmatmul.mubr.f32.gmra.mrb[0].mxu0 %v515
        %v1033 = vpop.f32.mrb[0].mxu0
        %v1034 = vadd.f32 %v450, %v1033
        %v1035 = vpop.f32.mrb[0].mxu0
        %v1036 = vadd.f32 %v450, %v1035
        %1037 = vmatprep.mubr.f32.mxu0 0.0
        %1038 = vmatmul.mubr.f32.gmra.mrb[0].mxu0 %v518
        %v1039 = vpop.f32.mrb[0].mxu0
        %v1040 = vadd.f32 %v455, %v1039
        %v1041 = vpop.f32.mrb[0].mxu0
        %v1042 = vadd.f32 %v455, %v1041
        %1043 = vmatprep.mubr.f32.mxu0 0.0
        %1044 = vmatmul.mubr.f32.gmra.mrb[0].mxu0 %v521
        %v1045 = vpop.f32.mrb[0].mxu0
        %v1046 = vadd.f32 %v460, %v1045
        %v1047 = vpop.f32.mrb[0].mxu0
        %v1048 = vadd.f32 %v460, %v1047
        %1049 = vmatprep.mubr.f32.mxu0 0.0
        %1050 = vmatmul.mubr.f32.gmra.mrb[0].mxu0 %v524
        %v1051 = vpop.f32.mrb[0].mxu0
        %v1052 = vadd.f32 %v465, %v1051
        %v1053 = vpop.f32.mrb[0].mxu0
        %v1054 = vadd.f32 %v465, %v1053
        %1055 = vmatprep.mubr.f32.mxu0 0.0
        %1056 = vmatmul.mubr.f32.gmra.mrb[0].mxu0 %v527
        %v1057 = vpop.f32.mrb[0].mxu0
        %v1058 = vadd.f32 %v470, %v1057
        %v1059 = vpop.f32.mrb[0].mxu0
        %v1060 = vadd.f32 %v470, %v1059
        %1061 = vmatprep.mubr.f32.mxu0 0.0
        %1062 = vmatmul.mubr.f32.gmra.mrb[0].mxu0 %v530
        %v1063 = vpop.f32.mrb[0].mxu0
        %v1064 = vadd.f32 %v475, %v1063
        %v1065 = vpop.f32.mrb[0].mxu0
        %v1066 = vadd.f32 %v475, %v1065
        %1067 = vmatprep.mubr.f32.mxu0 0.0
        %1068 = vmatmul.mubr.f32.gmra.mrb[0].mxu0 %v533
        %v1069 = vpop.f32.mrb[0].mxu0
        %v1070 = vadd.f32 %v480, %v1069
        %v1071 = vpop.f32.mrb[0].mxu0
        %v1072 = vadd.f32 %v480, %v1071
        %1073 = vmatprep.mubr.f32.mxu0 0.0
        %1074 = vmatmul.mubr.f32.gmra.mrb[0].mxu0 %v536
        %v1075 = vpop.f32.mrb[0].mxu0
        %v1076 = vadd.f32 %v485, %v1075
        %v1077 = vpop.f32.mrb[0].mxu0
        %v1078 = vadd.f32 %v485, %v1077
        %1079 = vmatprep.mubr.f32.mxu0 0.0
        %1080 = vmatmul.mubr.f32.gmra.mrb[0].mxu0 %v539
        %v1081 = vpop.f32.mrb[0].mxu0
        %v1082 = vadd.f32 %v490, %v1081
        %v1083 = vpop.f32.mrb[0].mxu0
        %v1084 = vadd.f32 %v490, %v1083
        %1085 = vdwg.mxu0
        %1086 = vmatprep.subr.mxu0 0.0
        %1087 = vmatpush1.xpose.msra.mxu0 %v638
        %1088 = vmatprep.subr.mxu0 0.0
        %1089 = vmatpush1.xpose.msra.mxu0 %v641
        %1090 = vmatprep.subr.mxu0 0.0
        %1091 = vmatpush1.xpose.msra.mxu0 %v644
        %1092 = vmatprep.subr.mxu0 0.0
        %1093 = vmatpush1.xpose.msra.mxu0 %v647
        %1094 = vmatprep.subr.mxu0 0.0
        %1095 = vmatpush1.xpose.msra.mxu0 %v650
        %1096 = vmatprep.subr.mxu0 0.0
        %1097 = vmatpush1.xpose.msra.mxu0 %v653
        %1098 = vmatprep.subr.mxu0 0.0
        %1099 = vmatpush1.xpose.msra.mxu0 %v656
        %1100 = vmatprep.subr.mxu0 0.0
        %1101 = vmatpush1.xpose.msra.mxu0 %v659
        %1102 = vmatprep.subr.mxu0 0.0
        %1103 = vmatpush1.xpose.msra.mxu0 %v662
        %1104 = vmatprep.subr.mxu0 0.0
        %1105 = vmatpush1.xpose.msra.mxu0 %v665
        %1106 = vmatprep.subr.mxu0 0.0
        %1107 = vmatpush1.xpose.msra.mxu0 %v668
        %1108 = vmatprep.subr.mxu0 0.0
        %1109 = vmatpush1.xpose.msra.mxu0 %v671
        %1110 = vmatprep.subr.mxu0 0.0
        %1111 = vmatpush1.xpose.msra.mxu0 %v674
        %1112 = vmatprep.subr.mxu0 0.0
        %1113 = vmatpush1.xpose.msra.mxu0 %v677
        %1114 = vmatprep.subr.mxu0 0.0
        %1115 = vmatpush1.xpose.msra.mxu0 %v680
        %1116 = vmatprep.subr.mxu0 0.0
        %1117 = vmatpush1.xpose.msra.mxu0 %v683
        %1118 = vmatprep.subr.mxu0 0.0
        %1119 = vmatpush1.xpose.msra.mxu0 %v686
        %1120 = vmatprep.subr.mxu0 0.0
        %1121 = vmatpush1.xpose.msra.mxu0 %v689
        %1122 = vmatprep.subr.mxu0 0.0
        %1123 = vmatpush1.xpose.msra.mxu0 %v692
        %1124 = vmatprep.subr.mxu0 0.0
        %1125 = vmatpush1.xpose.msra.mxu0 %v695
        %1126 = vmatprep.subr.mxu0 0.0
        %1127 = vmatpush1.xpose.msra.mxu0 %v698
        %1128 = vmatprep.subr.mxu0 0.0
        %1129 = vmatpush1.xpose.msra.mxu0 %v701
        %1130 = vmatprep.subr.mxu0 0.0
        %1131 = vmatpush1.xpose.msra.mxu0 %v704
        %1132 = vmatprep.subr.mxu0 0.0
        %1133 = vmatpush1.xpose.msra.mxu0 %v707
        %1134 = vmatprep.subr.mxu0 0.0
        %1135 = vmatpush1.xpose.msra.mxu0 %v710
        %1136 = vmatprep.subr.mxu0 0.0
        %1137 = vmatpush1.xpose.msra.mxu0 %v713
        %1138 = vmatprep.subr.mxu0 0.0
        %1139 = vmatpush1.xpose.msra.mxu0 %v716
        %1140 = vmatprep.subr.mxu0 0.0
        %1141 = vmatpush1.xpose.msra.mxu0 %v719
        %1142 = vmatprep.subr.mxu0 0.0
        %1143 = vmatpush1.xpose.msra.mxu0 %v722
        %1144 = vmatprep.subr.mxu0 0.0
        %1145 = vmatpush1.xpose.msra.mxu0 %v725
        %1146 = vmatprep.subr.mxu0 0.0
        %1147 = vmatpush1.xpose.msra.mxu0 %v728
        %1148 = vmatprep.subr.mxu0 0.0
        %1149 = vmatpush1.xpose.msra.mxu0 %v731
        %1150 = vmatprep.mubr.f32.mxu0 0.0
        %1151 = vmatmul.mubr.f32.gmra.mrb[0].mxu0 %v494
        %v1152 = vpop.f32.mrb[0].mxu0
        %v1153 = vadd.f32 %v415, %v1152
        %v1154 = vpop.f32.mrb[0].mxu0
        %v1155 = vadd.f32 %v415, %v1154
        %1156 = vmatprep.mubr.f32.mxu0 0.0
        %1157 = vmatmul.mubr.f32.gmra.mrb[0].mxu0 %v497
        %v1158 = vpop.f32.mrb[0].mxu0
        %v1159 = vadd.f32 %v420, %v1158
        %v1160 = vpop.f32.mrb[0].mxu0
        %v1161 = vadd.f32 %v420, %v1160
        %1162 = vmatprep.mubr.f32.mxu0 0.0
        %1163 = vmatmul.mubr.f32.gmra.mrb[0].mxu0 %v500
        %v1164 = vpop.f32.mrb[0].mxu0
        %v1165 = vadd.f32 %v425, %v1164
        %v1166 = vpop.f32.mrb[0].mxu0
        %v1167 = vadd.f32 %v425, %v1166
        %1168 = vmatprep.mubr.f32.mxu0 0.0
        %1169 = vmatmul.mubr.f32.gmra.mrb[0].mxu0 %v503
        %v1170 = vpop.f32.mrb[0].mxu0
        %v1171 = vadd.f32 %v430, %v1170
        %v1172 = vpop.f32.mrb[0].mxu0
        %v1173 = vadd.f32 %v430, %v1172
        %1174 = vmatprep.mubr.f32.mxu0 0.0
        %1175 = vmatmul.mubr.f32.gmra.mrb[0].mxu0 %v506
        %v1176 = vpop.f32.mrb[0].mxu0
        %v1177 = vadd.f32 %v435, %v1176
        %v1178 = vpop.f32.mrb[0].mxu0
        %v1179 = vadd.f32 %v435, %v1178
        %1180 = vmatprep.mubr.f32.mxu0 0.0
        %1181 = vmatmul.mubr.f32.gmra.mrb[0].mxu0 %v509
        %v1182 = vpop.f32.mrb[0].mxu0
        %v1183 = vadd.f32 %v440, %v1182
        %v1184 = vpop.f32.mrb[0].mxu0
        %v1185 = vadd.f32 %v440, %v1184
        %1186 = vmatprep.mubr.f32.mxu0 0.0
        %1187 = vmatmul.mubr.f32.gmra.mrb[0].mxu0 %v512
        %v1188 = vpop.f32.mrb[0].mxu0
        %v1189 = vadd.f32 %v445, %v1188
        %v1190 = vpop.f32.mrb[0].mxu0
        %v1191 = vadd.f32 %v445, %v1190
        %1192 = vmatprep.mubr.f32.mxu0 0.0
        %1193 = vmatmul.mubr.f32.gmra.mrb[0].mxu0 %v515
        %v1194 = vpop.f32.mrb[0].mxu0
        %v1195 = vadd.f32 %v450, %v1194
        %v1196 = vpop.f32.mrb[0].mxu0
        %v1197 = vadd.f32 %v450, %v1196
        %1198 = vmatprep.mubr.f32.mxu0 0.0
        %1199 = vmatmul.mubr.f32.gmra.mrb[0].mxu0 %v518
        %v1200 = vpop.f32.mrb[0].mxu0
        %v1201 = vadd.f32 %v455, %v1200
        %v1202 = vpop.f32.mrb[0].mxu0
        %v1203 = vadd.f32 %v455, %v1202
        %1204 = vmatprep.mubr.f32.mxu0 0.0
        %1205 = vmatmul.mubr.f32.gmra.mrb[0].mxu0 %v521
        %v1206 = vpop.f32.mrb[0].mxu0
        %v1207 = vadd.f32 %v460, %v1206
        %v1208 = vpop.f32.mrb[0].mxu0
        %v1209 = vadd.f32 %v460, %v1208
        %1210 = vmatprep.mubr.f32.mxu0 0.0
        %1211 = vmatmul.mubr.f32.gmra.mrb[0].mxu0 %v524
        %v1212 = vpop.f32.mrb[0].mxu0
        %v1213 = vadd.f32 %v465, %v1212
        %v1214 = vpop.f32.mrb[0].mxu0
        %v1215 = vadd.f32 %v465, %v1214
        %1216 = vmatprep.mubr.f32.mxu0 0.0
        %1217 = vmatmul.mubr.f32.gmra.mrb[0].mxu0 %v527
        %v1218 = vpop.f32.mrb[0].mxu0
        %v1219 = vadd.f32 %v470, %v1218
        %v1220 = vpop.f32.mrb[0].mxu0
        %v1221 = vadd.f32 %v470, %v1220
        %1222 = vmatprep.mubr.f32.mxu0 0.0
        %1223 = vmatmul.mubr.f32.gmra.mrb[0].mxu0 %v530
        %v1224 = vpop.f32.mrb[0].mxu0
        %v1225 = vadd.f32 %v475, %v1224
        %v1226 = vpop.f32.mrb[0].mxu0
        %v1227 = vadd.f32 %v475, %v1226
        %1228 = vmatprep.mubr.f32.mxu0 0.0
        %1229 = vmatmul.mubr.f32.gmra.mrb[0].mxu0 %v533
        %v1230 = vpop.f32.mrb[0].mxu0
        %v1231 = vadd.f32 %v480, %v1230
        %v1232 = vpop.f32.mrb[0].mxu0
        %v1233 = vadd.f32 %v480, %v1232
        %1234 = vmatprep.mubr.f32.mxu0 0.0
        %1235 = vmatmul.mubr.f32.gmra.mrb[0].mxu0 %v536
        %v1236 = vpop.f32.mrb[0].mxu0
        %v1237 = vadd.f32 %v485, %v1236
        %v1238 = vpop.f32.mrb[0].mxu0
        %v1239 = vadd.f32 %v485, %v1238
        %1240 = vmatprep.mubr.f32.mxu0 0.0
        %1241 = vmatmul.mubr.f32.gmra.mrb[0].mxu0 %v539
        %v1242 = vpop.f32.mrb[0].mxu0
        %v1243 = vadd.f32 %v490, %v1242
        %v1244 = vpop.f32.mrb[0].mxu0
        %v1245 = vadd.f32 %v490, %v1244
        %1246 = vdwg.mxu0
        %1247 = vmatprep.subr.mxu0 0.0
        %1248 = vmatpush1.xpose.msra.mxu0 %v734
        %1249 = vmatprep.subr.mxu0 0.0
        %1250 = vmatpush1.xpose.msra.mxu0 %v737
        %1251 = vmatprep.subr.mxu0 0.0
        %1252 = vmatpush1.xpose.msra.mxu0 %v740
        %1253 = vmatprep.subr.mxu0 0.0
        %1254 = vmatpush1.xpose.msra.mxu0 %v743
        %1255 = vmatprep.subr.mxu0 0.0
        %1256 = vmatpush1.xpose.msra.mxu0 %v746
        %1257 = vmatprep.subr.mxu0 0.0
        %1258 = vmatpush1.xpose.msra.mxu0 %v749
        %1259 = vmatprep.subr.mxu0 0.0
        %1260 = vmatpush1.xpose.msra.mxu0 %v752
        %1261 = vmatprep.subr.mxu0 0.0
        %1262 = vmatpush1.xpose.msra.mxu0 %v755
        %1263 = vmatprep.subr.mxu0 0.0
        %1264 = vmatpush1.xpose.msra.mxu0 %v758
        %1265 = vmatprep.subr.mxu0 0.0
        %1266 = vmatpush1.xpose.msra.mxu0 %v761
        %1267 = vmatprep.subr.mxu0 0.0
        %1268 = vmatpush1.xpose.msra.mxu0 %v764
        %1269 = vmatprep.subr.mxu0 0.0
        %1270 = vmatpush1.xpose.msra.mxu0 %v767
        %1271 = vmatprep.subr.mxu0 0.0
        %1272 = vmatpush1.xpose.msra.mxu0 %v770
        %1273 = vmatprep.subr.mxu0 0.0
        %1274 = vmatpush1.xpose.msra.mxu0 %v773
        %1275 = vmatprep.subr.mxu0 0.0
        %1276 = vmatpush1.xpose.msra.mxu0 %v776
        %1277 = vmatprep.subr.mxu0 0.0
        %1278 = vmatpush1.xpose.msra.mxu0 %v779
        %1279 = vmatprep.subr.mxu0 0.0
        %1280 = vmatpush1.xpose.msra.mxu0 %v782
        %1281 = vmatprep.subr.mxu0 0.0
        %1282 = vmatpush1.xpose.msra.mxu0 %v785
        %1283 = vmatprep.subr.mxu0 0.0
        %1284 = vmatpush1.xpose.msra.mxu0 %v788
        %1285 = vmatprep.subr.mxu0 0.0
        %1286 = vmatpush1.xpose.msra.mxu0 %v791
        %1287 = vmatprep.subr.mxu0 0.0
        %1288 = vmatpush1.xpose.msra.mxu0 %v794
        %1289 = vmatprep.subr.mxu0 0.0
        %1290 = vmatpush1.xpose.msra.mxu0 %v797
        %1291 = vmatprep.subr.mxu0 0.0
        %1292 = vmatpush1.xpose.msra.mxu0 %v800
        %1293 = vmatprep.subr.mxu0 0.0
        %1294 = vmatpush1.xpose.msra.mxu0 %v803
        %1295 = vmatprep.subr.mxu0 0.0
        %1296 = vmatpush1.xpose.msra.mxu0 %v806
        %1297 = vmatprep.subr.mxu0 0.0
        %1298 = vmatpush1.xpose.msra.mxu0 %v809
        %1299 = vmatprep.subr.mxu0 0.0
        %1300 = vmatpush1.xpose.msra.mxu0 %v812
        %1301 = vmatprep.subr.mxu0 0.0
        %1302 = vmatpush1.xpose.msra.mxu0 %v815
        %1303 = vmatprep.subr.mxu0 0.0
        %1304 = vmatpush1.xpose.msra.mxu0 %v818
        %1305 = vmatprep.subr.mxu0 0.0
        %1306 = vmatpush1.xpose.msra.mxu0 %v821
        %1307 = vmatprep.subr.mxu0 0.0
        %1308 = vmatpush1.xpose.msra.mxu0 %v824
        %1309 = vmatprep.subr.mxu0 0.0
        %1310 = vmatpush1.xpose.msra.mxu0 %v827
        %1311 = vmatprep.mubr.f32.mxu0 0.0
        %1312 = vmatmul.mubr.f32.gmra.mrb[0].mxu0 %v494
        %v1313 = vpop.f32.mrb[0].mxu0
        %v1314 = vadd.f32 %v415, %v1313
        %v1315 = vpop.f32.mrb[0].mxu0
        %v1316 = vadd.f32 %v415, %v1315
        %1317 = vmatprep.mubr.f32.mxu0 0.0
        %1318 = vmatmul.mubr.f32.gmra.mrb[0].mxu0 %v497
        %v1319 = vpop.f32.mrb[0].mxu0
        %v1320 = vadd.f32 %v420, %v1319
        %v1321 = vpop.f32.mrb[0].mxu0
        %v1322 = vadd.f32 %v420, %v1321
        %1323 = vmatprep.mubr.f32.mxu0 0.0
        %1324 = vmatmul.mubr.f32.gmra.mrb[0].mxu0 %v500
        %v1325 = vpop.f32.mrb[0].mxu0
        %v1326 = vadd.f32 %v425, %v1325
        %v1327 = vpop.f32.mrb[0].mxu0
        %v1328 = vadd.f32 %v425, %v1327
        %1329 = vmatprep.mubr.f32.mxu0 0.0
        %1330 = vmatmul.mubr.f32.gmra.mrb[0].mxu0 %v503
        %v1331 = vpop.f32.mrb[0].mxu0
        %v1332 = vadd.f32 %v430, %v1331
        %v1333 = vpop.f32.mrb[0].mxu0
        %v1334 = vadd.f32 %v430, %v1333
        %1335 = vmatprep.mubr.f32.mxu0 0.0
        %1336 = vmatmul.mubr.f32.gmra.mrb[0].mxu0 %v506
        %v1337 = vpop.f32.mrb[0].mxu0
        %v1338 = vadd.f32 %v435, %v1337
        %v1339 = vpop.f32.mrb[0].mxu0
        %v1340 = vadd.f32 %v435, %v1339
        %1341 = vmatprep.mubr.f32.mxu0 0.0
        %1342 = vmatmul.mubr.f32.gmra.mrb[0].mxu0 %v509
        %v1343 = vpop.f32.mrb[0].mxu0
        %v1344 = vadd.f32 %v440, %v1343
        %v1345 = vpop.f32.mrb[0].mxu0
        %v1346 = vadd.f32 %v440, %v1345
        %1347 = vmatprep.mubr.f32.mxu0 0.0
        %1348 = vmatmul.mubr.f32.gmra.mrb[0].mxu0 %v512
        %v1349 = vpop.f32.mrb[0].mxu0
        %v1350 = vadd.f32 %v445, %v1349
        %v1351 = vpop.f32.mrb[0].mxu0
        %v1352 = vadd.f32 %v445, %v1351
        %1353 = vmatprep.mubr.f32.mxu0 0.0
        %1354 = vmatmul.mubr.f32.gmra.mrb[0].mxu0 %v515
        %v1355 = vpop.f32.mrb[0].mxu0
        %v1356 = vadd.f32 %v450, %v1355
        %v1357 = vpop.f32.mrb[0].mxu0
        %v1358 = vadd.f32 %v450, %v1357
        %1359 = vmatprep.mubr.f32.mxu0 0.0
        %1360 = vmatmul.mubr.f32.gmra.mrb[0].mxu0 %v518
        %v1361 = vpop.f32.mrb[0].mxu0
        %v1362 = vadd.f32 %v455, %v1361
        %v1363 = vpop.f32.mrb[0].mxu0
        %v1364 = vadd.f32 %v455, %v1363
        %1365 = vmatprep.mubr.f32.mxu0 0.0
        %1366 = vmatmul.mubr.f32.gmra.mrb[0].mxu0 %v521
        %v1367 = vpop.f32.mrb[0].mxu0
        %v1368 = vadd.f32 %v460, %v1367
        %v1369 = vpop.f32.mrb[0].mxu0
        %v1370 = vadd.f32 %v460, %v1369
        %1371 = vmatprep.mubr.f32.mxu0 0.0
        %1372 = vmatmul.mubr.f32.gmra.mrb[0].mxu0 %v524
        %v1373 = vpop.f32.mrb[0].mxu0
        %v1374 = vadd.f32 %v465, %v1373
        %v1375 = vpop.f32.mrb[0].mxu0
        %v1376 = vadd.f32 %v465, %v1375
        %1377 = vmatprep.mubr.f32.mxu0 0.0
        %1378 = vmatmul.mubr.f32.gmra.mrb[0].mxu0 %v527
        %v1379 = vpop.f32.mrb[0].mxu0
        %v1380 = vadd.f32 %v470, %v1379
        %v1381 = vpop.f32.mrb[0].mxu0
        %v1382 = vadd.f32 %v470, %v1381
        %1383 = vmatprep.mubr.f32.mxu0 0.0
        %1384 = vmatmul.mubr.f32.gmra.mrb[0].mxu0 %v530
        %v1385 = vpop.f32.mrb[0].mxu0
        %v1386 = vadd.f32 %v475, %v1385
        %v1387 = vpop.f32.mrb[0].mxu0
        %v1388 = vadd.f32 %v475, %v1387
        %1389 = vmatprep.mubr.f32.mxu0 0.0
        %1390 = vmatmul.mubr.f32.gmra.mrb[0].mxu0 %v533
        %v1391 = vpop.f32.mrb[0].mxu0
        %v1392 = vadd.f32 %v480, %v1391
        %v1393 = vpop.f32.mrb[0].mxu0
        %v1394 = vadd.f32 %v480, %v1393
        %1395 = vmatprep.mubr.f32.mxu0 0.0
        %1396 = vmatmul.mubr.f32.gmra.mrb[0].mxu0 %v536
        %v1397 = vpop.f32.mrb[0].mxu0
        %v1398 = vadd.f32 %v485, %v1397
        %v1399 = vpop.f32.mrb[0].mxu0
        %v1400 = vadd.f32 %v485, %v1399
        %1401 = vmatprep.mubr.f32.mxu0 0.0
        %1402 = vmatmul.mubr.f32.gmra.mrb[0].mxu0 %v539
        %v1403 = vpop.f32.mrb[0].mxu0
        %v1404 = vadd.f32 %v490, %v1403
        %v1405 = vpop.f32.mrb[0].mxu0
        %v1406 = vadd.f32 %v490, %v1405
        %1407 = vdwg.mxu0
        %1408 = vmatprep.subr.mxu0 0.0
        %1409 = vmatpush1.xpose.msra.mxu0 %v830
        %1410 = vmatprep.subr.mxu0 0.0
        %1411 = vmatpush1.xpose.msra.mxu0 %v833
        %1412 = vmatprep.subr.mxu0 0.0
        %1413 = vmatpush1.xpose.msra.mxu0 %v836
        %1414 = vmatprep.subr.mxu0 0.0
        %1415 = vmatpush1.xpose.msra.mxu0 %v839
        %1416 = vmatprep.subr.mxu0 0.0
        %1417 = vmatpush1.xpose.msra.mxu0 %v842
        %1418 = vmatprep.subr.mxu0 0.0
        %1419 = vmatpush1.xpose.msra.mxu0 %v845
        %1420 = vmatprep.subr.mxu0 0.0
        %1421 = vmatpush1.xpose.msra.mxu0 %v848
        %1422 = vmatprep.subr.mxu0 0.0
        %1423 = vmatpush1.xpose.msra.mxu0 %v851
        %1424 = vmatprep.subr.mxu0 0.0
        %1425 = vmatpush1.xpose.msra.mxu0 %v854
        %1426 = vmatprep.subr.mxu0 0.0
        %1427 = vmatpush1.xpose.msra.mxu0 %v857
        %1428 = vmatprep.subr.mxu0 0.0
        %1429 = vmatpush1.xpose.msra.mxu0 %v860
        %1430 = vmatprep.subr.mxu0 0.0
        %1431 = vmatpush1.xpose.msra.mxu0 %v863
        %1432 = vmatprep.subr.mxu0 0.0
        %1433 = vmatpush1.xpose.msra.mxu0 %v866
        %1434 = vmatprep.subr.mxu0 0.0
        %1435 = vmatpush1.xpose.msra.mxu0 %v869
        %1436 = vmatprep.subr.mxu0 0.0
        %1437 = vmatpush1.xpose.msra.mxu0 %v872
        %1438 = vmatprep.subr.mxu0 0.0
        %1439 = vmatpush1.xpose.msra.mxu0 %v875
        %1440 = vmatprep.subr.mxu0 0.0
        %1441 = vmatpush1.xpose.msra.mxu0 %v878
        %1442 = vmatprep.subr.mxu0 0.0
        %1443 = vmatpush1.xpose.msra.mxu0 %v881
        %1444 = vmatprep.subr.mxu0 0.0
        %1445 = vmatpush1.xpose.msra.mxu0 %v884
        %1446 = vmatprep.subr.mxu0 0.0
        %1447 = vmatpush1.xpose.msra.mxu0 %v887
        %1448 = vmatprep.subr.mxu0 0.0
        %1449 = vmatpush1.xpose.msra.mxu0 %v890
        %1450 = vmatprep.subr.mxu0 0.0
        %1451 = vmatpush1.xpose.msra.mxu0 %v893
        %1452 = vmatprep.subr.mxu0 0.0
        %1453 = vmatpush1.xpose.msra.mxu0 %v896
        %1454 = vmatprep.subr.mxu0 0.0
        %1455 = vmatpush1.xpose.msra.mxu0 %v899
        %1456 = vmatprep.subr.mxu0 0.0
        %1457 = vmatpush1.xpose.msra.mxu0 %v902
        %1458 = vmatprep.subr.mxu0 0.0
        %1459 = vmatpush1.xpose.msra.mxu0 %v905
        %1460 = vmatprep.subr.mxu0 0.0
        %1461 = vmatpush1.xpose.msra.mxu0 %v908
        %1462 = vmatprep.subr.mxu0 0.0
        %1463 = vmatpush1.xpose.msra.mxu0 %v911
        %1464 = vmatprep.subr.mxu0 0.0
        %1465 = vmatpush1.xpose.msra.mxu0 %v914
        %1466 = vmatprep.subr.mxu0 0.0
        %1467 = vmatpush1.xpose.msra.mxu0 %v917
        %1468 = vmatprep.subr.mxu0 0.0
        %1469 = vmatpush1.xpose.msra.mxu0 %v920
        %1470 = vmatprep.subr.mxu0 0.0
        %1471 = vmatpush1.xpose.msra.mxu0 %v923
        %1472 = vmatprep.mubr.f32.mxu0 0.0
        %1473 = vmatmul.mubr.f32.gmra.mrb[0].mxu0 %v494
        %v1474 = vpop.f32.mrb[0].mxu0
        %v1475 = vadd.f32 %v415, %v1474
        %v1476 = vpop.f32.mrb[0].mxu0
        %v1477 = vadd.f32 %v415, %v1476
        %1478 = vmatprep.mubr.f32.mxu0 0.0
        %1479 = vmatmul.mubr.f32.gmra.mrb[0].mxu0 %v497
        %v1480 = vpop.f32.mrb[0].mxu0
        %v1481 = vadd.f32 %v420, %v1480
        %v1482 = vpop.f32.mrb[0].mxu0
        %v1483 = vadd.f32 %v420, %v1482
        %1484 = vmatprep.mubr.f32.mxu0 0.0
        %1485 = vmatmul.mubr.f32.gmra.mrb[0].mxu0 %v500
        %v1486 = vpop.f32.mrb[0].mxu0
        %v1487 = vadd.f32 %v425, %v1486
        %v1488 = vpop.f32.mrb[0].mxu0
        %v1489 = vadd.f32 %v425, %v1488
        %1490 = vmatprep.mubr.f32.mxu0 0.0
        %1491 = vmatmul.mubr.f32.gmra.mrb[0].mxu0 %v503
        %v1492 = vpop.f32.mrb[0].mxu0
        %v1493 = vadd.f32 %v430, %v1492
        %v1494 = vpop.f32.mrb[0].mxu0
        %v1495 = vadd.f32 %v430, %v1494
        %1496 = vmatprep.mubr.f32.mxu0 0.0
        %1497 = vmatmul.mubr.f32.gmra.mrb[0].mxu0 %v506
        %v1498 = vpop.f32.mrb[0].mxu0
        %v1499 = vadd.f32 %v435, %v1498
        %v1500 = vpop.f32.mrb[0].mxu0
        %v1501 = vadd.f32 %v435, %v1500
        %1502 = vmatprep.mubr.f32.mxu0 0.0
        %1503 = vmatmul.mubr.f32.gmra.mrb[0].mxu0 %v509
        %v1504 = vpop.f32.mrb[0].mxu0
        %v1505 = vadd.f32 %v440, %v1504
        %v1506 = vpop.f32.mrb[0].mxu0
        %v1507 = vadd.f32 %v440, %v1506
        %1508 = vmatprep.mubr.f32.mxu0 0.0
        %1509 = vmatmul.mubr.f32.gmra.mrb[0].mxu0 %v512
        %v1510 = vpop.f32.mrb[0].mxu0
        %v1511 = vadd.f32 %v445, %v1510
        %v1512 = vpop.f32.mrb[0].mxu0
        %v1513 = vadd.f32 %v445, %v1512
        %1514 = vmatprep.mubr.f32.mxu0 0.0
        %1515 = vmatmul.mubr.f32.gmra.mrb[0].mxu0 %v515
        %v1516 = vpop.f32.mrb[0].mxu0
        %v1517 = vadd.f32 %v450, %v1516
        %v1518 = vpop.f32.mrb[0].mxu0
        %v1519 = vadd.f32 %v450, %v1518
        %1520 = vmatprep.mubr.f32.mxu0 0.0
        %1521 = vmatmul.mubr.f32.gmra.mrb[0].mxu0 %v518
        %v1522 = vpop.f32.mrb[0].mxu0
        %v1523 = vadd.f32 %v455, %v1522
        %v1524 = vpop.f32.mrb[0].mxu0
        %v1525 = vadd.f32 %v455, %v1524
        %1526 = vmatprep.mubr.f32.mxu0 0.0
        %1527 = vmatmul.mubr.f32.gmra.mrb[0].mxu0 %v521
        %v1528 = vpop.f32.mrb[0].mxu0
        %v1529 = vadd.f32 %v460, %v1528
        %v1530 = vpop.f32.mrb[0].mxu0
        %v1531 = vadd.f32 %v460, %v1530
        %1532 = vmatprep.mubr.f32.mxu0 0.0
        %1533 = vmatmul.mubr.f32.gmra.mrb[0].mxu0 %v524
        %v1534 = vpop.f32.mrb[0].mxu0
        %v1535 = vadd.f32 %v465, %v1534
        %v1536 = vpop.f32.mrb[0].mxu0
        %v1537 = vadd.f32 %v465, %v1536
        %1538 = vmatprep.mubr.f32.mxu0 0.0
        %1539 = vmatmul.mubr.f32.gmra.mrb[0].mxu0 %v527
        %v1540 = vpop.f32.mrb[0].mxu0
        %v1541 = vadd.f32 %v470, %v1540
        %v1542 = vpop.f32.mrb[0].mxu0
        %v1543 = vadd.f32 %v470, %v1542
        %1544 = vmatprep.mubr.f32.mxu0 0.0
        %1545 = vmatmul.mubr.f32.gmra.mrb[0].mxu0 %v530
        %v1546 = vpop.f32.mrb[0].mxu0
        %v1547 = vadd.f32 %v475, %v1546
        %v1548 = vpop.f32.mrb[0].mxu0
        %v1549 = vadd.f32 %v475, %v1548
        %1550 = vmatprep.mubr.f32.mxu0 0.0
        %1551 = vmatmul.mubr.f32.gmra.mrb[0].mxu0 %v533
        %v1552 = vpop.f32.mrb[0].mxu0
        %v1553 = vadd.f32 %v480, %v1552
        %v1554 = vpop.f32.mrb[0].mxu0
        %v1555 = vadd.f32 %v480, %v1554
        %1556 = vmatprep.mubr.f32.mxu0 0.0
        %1557 = vmatmul.mubr.f32.gmra.mrb[0].mxu0 %v536
        %v1558 = vpop.f32.mrb[0].mxu0
        %v1559 = vadd.f32 %v485, %v1558
        %v1560 = vpop.f32.mrb[0].mxu0
        %v1561 = vadd.f32 %v485, %v1560
        %1562 = vmatprep.mubr.f32.mxu0 0.0
        %1563 = vmatmul.mubr.f32.gmra.mrb[0].mxu0 %v539
        %v1564 = vpop.f32.mrb[0].mxu0
        %v1565 = vadd.f32 %v490, %v1564
        %v1566 = vpop.f32.mrb[0].mxu0
        %v1567 = vadd.f32 %v490, %v1566
        %1568 = vdwg.mxu0
        %v1569 = vmax.f32 %v992, 0.0
        %v1570 = vmax.f32 %v994, 0.0
        %v1571 = vmax.f32 %v1153, 0.0
        %v1572 = vmax.f32 %v1155, 0.0
        %v1573 = vmax.f32 %v1314, 0.0
        %v1574 = vmax.f32 %v1316, 0.0
        %v1575 = vmax.f32 %v1475, 0.0
        %v1576 = vmax.f32 %v1477, 0.0
        %v1577 = vmax.f32 %v998, 0.0
        %v1578 = vmax.f32 %v1000, 0.0
        %v1579 = vmax.f32 %v1159, 0.0
        %v1580 = vmax.f32 %v1161, 0.0
        %v1581 = vmax.f32 %v1320, 0.0
        %v1582 = vmax.f32 %v1322, 0.0
        %v1583 = vmax.f32 %v1481, 0.0
        %v1584 = vmax.f32 %v1483, 0.0
        %v1585 = vmax.f32 %v1004, 0.0
        %v1586 = vmax.f32 %v1006, 0.0
        %v1587 = vmax.f32 %v1165, 0.0
        %v1588 = vmax.f32 %v1167, 0.0
        %v1589 = vmax.f32 %v1326, 0.0
        %v1590 = vmax.f32 %v1328, 0.0
        %v1591 = vmax.f32 %v1487, 0.0
        %v1592 = vmax.f32 %v1489, 0.0
        %v1593 = vmax.f32 %v1010, 0.0
        %v1594 = vmax.f32 %v1012, 0.0
        %v1595 = vmax.f32 %v1171, 0.0
        %v1596 = vmax.f32 %v1173, 0.0
        %v1597 = vmax.f32 %v1332, 0.0
        %v1598 = vmax.f32 %v1334, 0.0
        %v1599 = vmax.f32 %v1493, 0.0
        %v1600 = vmax.f32 %v1495, 0.0
        %v1601 = vmax.f32 %v1016, 0.0
        %v1602 = vmax.f32 %v1018, 0.0
        %v1603 = vmax.f32 %v1177, 0.0
        %v1604 = vmax.f32 %v1179, 0.0
        %v1605 = vmax.f32 %v1338, 0.0
        %v1606 = vmax.f32 %v1340, 0.0
        %v1607 = vmax.f32 %v1499, 0.0
        %v1608 = vmax.f32 %v1501, 0.0
        %v1609 = vmax.f32 %v1022, 0.0
        %v1610 = vmax.f32 %v1024, 0.0
        %v1611 = vmax.f32 %v1183, 0.0
        %v1612 = vmax.f32 %v1185, 0.0
        %v1613 = vmax.f32 %v1344, 0.0
        %v1614 = vmax.f32 %v1346, 0.0
        %v1615 = vmax.f32 %v1505, 0.0
        %v1616 = vmax.f32 %v1507, 0.0
        %v1617 = vmax.f32 %v1028, 0.0
        %v1618 = vmax.f32 %v1030, 0.0
        %v1619 = vmax.f32 %v1189, 0.0
        %v1620 = vmax.f32 %v1191, 0.0
        %v1621 = vmax.f32 %v1350, 0.0
        %v1622 = vmax.f32 %v1352, 0.0
        %v1623 = vmax.f32 %v1511, 0.0
        %v1624 = vmax.f32 %v1513, 0.0
        %v1625 = vmax.f32 %v1034, 0.0
        %v1626 = vmax.f32 %v1036, 0.0
        %v1627 = vmax.f32 %v1195, 0.0
        %v1628 = vmax.f32 %v1197, 0.0
        %v1629 = vmax.f32 %v1356, 0.0
        %v1630 = vmax.f32 %v1358, 0.0
        %v1631 = vmax.f32 %v1517, 0.0
        %v1632 = vmax.f32 %v1519, 0.0
        %v1633 = vmax.f32 %v1040, 0.0
        %v1634 = vmax.f32 %v1042, 0.0
        %v1635 = vmax.f32 %v1201, 0.0
        %v1636 = vmax.f32 %v1203, 0.0
        %v1637 = vmax.f32 %v1362, 0.0
        %v1638 = vmax.f32 %v1364, 0.0
        %v1639 = vmax.f32 %v1523, 0.0
        %v1640 = vmax.f32 %v1525, 0.0
        %v1641 = vmax.f32 %v1046, 0.0
        %v1642 = vmax.f32 %v1048, 0.0
        %v1643 = vmax.f32 %v1207, 0.0
        %v1644 = vmax.f32 %v1209, 0.0
        %v1645 = vmax.f32 %v1368, 0.0
        %v1646 = vmax.f32 %v1370, 0.0
        %v1647 = vmax.f32 %v1529, 0.0
        %v1648 = vmax.f32 %v1531, 0.0
        %v1649 = vmax.f32 %v1052, 0.0
        %v1650 = vmax.f32 %v1054, 0.0
        %v1651 = vmax.f32 %v1213, 0.0
        %v1652 = vmax.f32 %v1215, 0.0
        %v1653 = vmax.f32 %v1374, 0.0
        %v1654 = vmax.f32 %v1376, 0.0
        %v1655 = vmax.f32 %v1535, 0.0
        %v1656 = vmax.f32 %v1537, 0.0
        %v1657 = vmax.f32 %v1058, 0.0
        %v1658 = vmax.f32 %v1060, 0.0
        %v1659 = vmax.f32 %v1219, 0.0
        %v1660 = vmax.f32 %v1221, 0.0
        %v1661 = vmax.f32 %v1380, 0.0
        %v1662 = vmax.f32 %v1382, 0.0
        %v1663 = vmax.f32 %v1541, 0.0
        %v1664 = vmax.f32 %v1543, 0.0
        %v1665 = vmax.f32 %v1064, 0.0
        %v1666 = vmax.f32 %v1066, 0.0
        %v1667 = vmax.f32 %v1225, 0.0
        %v1668 = vmax.f32 %v1227, 0.0
        %v1669 = vmax.f32 %v1386, 0.0
        %v1670 = vmax.f32 %v1388, 0.0
        %v1671 = vmax.f32 %v1547, 0.0
        %v1672 = vmax.f32 %v1549, 0.0
        %v1673 = vmax.f32 %v1070, 0.0
        %v1674 = vmax.f32 %v1072, 0.0
        %v1675 = vmax.f32 %v1231, 0.0
        %v1676 = vmax.f32 %v1233, 0.0
        %v1677 = vmax.f32 %v1392, 0.0
        %v1678 = vmax.f32 %v1394, 0.0
        %v1679 = vmax.f32 %v1553, 0.0
        %v1680 = vmax.f32 %v1555, 0.0
        %v1681 = vmax.f32 %v1076, 0.0
        %v1682 = vmax.f32 %v1078, 0.0
        %v1683 = vmax.f32 %v1237, 0.0
        %v1684 = vmax.f32 %v1239, 0.0
        %v1685 = vmax.f32 %v1398, 0.0
        %v1686 = vmax.f32 %v1400, 0.0
        %v1687 = vmax.f32 %v1559, 0.0
        %v1688 = vmax.f32 %v1561, 0.0
        %v1689 = vmax.f32 %v1082, 0.0
        %v1690 = vmax.f32 %v1084, 0.0
        %v1691 = vmax.f32 %v1243, 0.0
        %v1692 = vmax.f32 %v1245, 0.0
        %v1693 = vmax.f32 %v1404, 0.0
        %v1694 = vmax.f32 %v1406, 0.0
        %v1695 = vmax.f32 %v1565, 0.0
        %v1696 = vmax.f32 %v1567, 0.0
        %v1697 = vld [vmem:[%s3] sm:$0x1]
        %v1698 = vld [vmem:[#allocation2] sm:$0x1]
        %1700 = vset.pattern.permute.xlu0 0
        %1701 = vperm.xlu0 %1700, %v1698
        %v1702 = vpop.permute.xlu0 %1701
        %v1704 = vlaneseq
        %v1705 = vshrl.u32 %v1704, 7
        %v1706 = vsub.s32 0, %v1705
        %v1707 = vrot.slane %v1702, %v1706
        %1708 = vmatprep.subr.mxu0 %v1570
        %1709 = vmatpush1.msra.mxu0 %v1569
        %1710 = vmatprep.subr.mxu0 %v1578
        %1711 = vmatpush1.msra.mxu0 %v1577
        %1712 = vmatprep.subr.mxu0 %v1586
        %1713 = vmatpush1.msra.mxu0 %v1585
        %1714 = vmatprep.subr.mxu0 %v1594
        %1715 = vmatpush1.msra.mxu0 %v1593
        %1716 = vmatprep.subr.mxu0 %v1602
        %1717 = vmatpush1.msra.mxu0 %v1601
        %1718 = vmatprep.subr.mxu0 %v1610
        %1719 = vmatpush1.msra.mxu0 %v1609
        %1720 = vmatprep.subr.mxu0 %v1618
        %1721 = vmatpush1.msra.mxu0 %v1617
        %1722 = vmatprep.subr.mxu0 %v1626
        %1723 = vmatpush1.msra.mxu0 %v1625
        %1724 = vmatprep.subr.mxu0 %v1634
        %1725 = vmatpush1.msra.mxu0 %v1633
        %1726 = vmatprep.subr.mxu0 %v1642
        %1727 = vmatpush1.msra.mxu0 %v1641
        %1728 = vmatprep.subr.mxu0 %v1650
        %1729 = vmatpush1.msra.mxu0 %v1649
        %1730 = vmatprep.subr.mxu0 %v1658
        %1731 = vmatpush1.msra.mxu0 %v1657
        %1732 = vmatprep.subr.mxu0 %v1666
        %1733 = vmatpush1.msra.mxu0 %v1665
        %1734 = vmatprep.subr.mxu0 %v1674
        %1735 = vmatpush1.msra.mxu0 %v1673
        %1736 = vmatprep.subr.mxu0 %v1682
        %1737 = vmatpush1.msra.mxu0 %v1681
        %1738 = vmatprep.subr.mxu0 %v1690
        %1739 = vmatpush1.msra.mxu0 %v1689
        %1740 = vmatprep.subr.mxu0 0.0
        %1741 = vmatpush1.msra.mxu0 0.0
        %1742 = vmatprep.subr.mxu0 0.0
        %1743 = vmatpush1.msra.mxu0 0.0
        %1744 = vmatprep.subr.mxu0 0.0
        %1745 = vmatpush1.msra.mxu0 0.0
        %1746 = vmatprep.subr.mxu0 0.0
        %1747 = vmatpush1.msra.mxu0 0.0
        %1748 = vmatprep.subr.mxu0 0.0
        %1749 = vmatpush1.msra.mxu0 0.0
        %1750 = vmatprep.subr.mxu0 0.0
        %1751 = vmatpush1.msra.mxu0 0.0
        %1752 = vmatprep.subr.mxu0 0.0
        %1753 = vmatpush1.msra.mxu0 0.0
        %1754 = vmatprep.subr.mxu0 0.0
        %1755 = vmatpush1.msra.mxu0 0.0
        %1756 = vmatprep.subr.mxu0 0.0
        %1757 = vmatpush1.msra.mxu0 0.0
        %1758 = vmatprep.subr.mxu0 0.0
        %1759 = vmatpush1.msra.mxu0 0.0
        %1760 = vmatprep.subr.mxu0 0.0
        %1761 = vmatpush1.msra.mxu0 0.0
        %1762 = vmatprep.subr.mxu0 0.0
        %1763 = vmatpush1.msra.mxu0 0.0
        %1764 = vmatprep.subr.mxu0 0.0
        %1765 = vmatpush1.msra.mxu0 0.0
        %1766 = vmatprep.subr.mxu0 0.0
        %1767 = vmatpush1.msra.mxu0 0.0
        %1768 = vmatprep.subr.mxu0 0.0
        %1769 = vmatpush1.msra.mxu0 0.0
        %1770 = vmatprep.subr.mxu0 0.0
        %1771 = vmatpush1.msra.mxu0 0.0
        %1772 = vmatprep.mubr.f32.mxu0 0.0
        %1773 = vmatmul.mubr.f32.gmra.mrb[0].mxu0 %v1697
        %v1774 = vpop.f32.mrb[0].mxu0
        %v1775 = vadd.f32 %v1707, %v1774
        %v1776 = vpop.f32.mrb[0].mxu0
        %v1777 = vadd.f32 %v1707, %v1776
        %1778 = vdwg.mxu0
        %1779 = vmatprep.subr.mxu0 %v1572
        %1780 = vmatpush1.msra.mxu0 %v1571
        %1781 = vmatprep.subr.mxu0 %v1580
        %1782 = vmatpush1.msra.mxu0 %v1579
        %1783 = vmatprep.subr.mxu0 %v1588
        %1784 = vmatpush1.msra.mxu0 %v1587
        %1785 = vmatprep.subr.mxu0 %v1596
        %1786 = vmatpush1.msra.mxu0 %v1595
        %1787 = vmatprep.subr.mxu0 %v1604
        %1788 = vmatpush1.msra.mxu0 %v1603
        %1789 = vmatprep.subr.mxu0 %v1612
        %1790 = vmatpush1.msra.mxu0 %v1611
        %1791 = vmatprep.subr.mxu0 %v1620
        %1792 = vmatpush1.msra.mxu0 %v1619
        %1793 = vmatprep.subr.mxu0 %v1628
        %1794 = vmatpush1.msra.mxu0 %v1627
        %1795 = vmatprep.subr.mxu0 %v1636
        %1796 = vmatpush1.msra.mxu0 %v1635
        %1797 = vmatprep.subr.mxu0 %v1644
        %1798 = vmatpush1.msra.mxu0 %v1643
        %1799 = vmatprep.subr.mxu0 %v1652
        %1800 = vmatpush1.msra.mxu0 %v1651
        %1801 = vmatprep.subr.mxu0 %v1660
        %1802 = vmatpush1.msra.mxu0 %v1659
        %1803 = vmatprep.subr.mxu0 %v1668
        %1804 = vmatpush1.msra.mxu0 %v1667
        %1805 = vmatprep.subr.mxu0 %v1676
        %1806 = vmatpush1.msra.mxu0 %v1675
        %1807 = vmatprep.subr.mxu0 %v1684
        %1808 = vmatpush1.msra.mxu0 %v1683
        %1809 = vmatprep.subr.mxu0 %v1692
        %1810 = vmatpush1.msra.mxu0 %v1691
        %1811 = vmatprep.subr.mxu0 0.0
        %1812 = vmatpush1.msra.mxu0 0.0
        %1813 = vmatprep.subr.mxu0 0.0
        %1814 = vmatpush1.msra.mxu0 0.0
        %1815 = vmatprep.subr.mxu0 0.0
        %1816 = vmatpush1.msra.mxu0 0.0
        %1817 = vmatprep.subr.mxu0 0.0
        %1818 = vmatpush1.msra.mxu0 0.0
        %1819 = vmatprep.subr.mxu0 0.0
        %1820 = vmatpush1.msra.mxu0 0.0
        %1821 = vmatprep.subr.mxu0 0.0
        %1822 = vmatpush1.msra.mxu0 0.0
        %1823 = vmatprep.subr.mxu0 0.0
        %1824 = vmatpush1.msra.mxu0 0.0
        %1825 = vmatprep.subr.mxu0 0.0
        %1826 = vmatpush1.msra.mxu0 0.0
        %1827 = vmatprep.subr.mxu0 0.0
        %1828 = vmatpush1.msra.mxu0 0.0
        %1829 = vmatprep.subr.mxu0 0.0
        %1830 = vmatpush1.msra.mxu0 0.0
        %1831 = vmatprep.subr.mxu0 0.0
        %1832 = vmatpush1.msra.mxu0 0.0
        %1833 = vmatprep.subr.mxu0 0.0
        %1834 = vmatpush1.msra.mxu0 0.0
        %1835 = vmatprep.subr.mxu0 0.0
        %1836 = vmatpush1.msra.mxu0 0.0
        %1837 = vmatprep.subr.mxu0 0.0
        %1838 = vmatpush1.msra.mxu0 0.0
        %1839 = vmatprep.subr.mxu0 0.0
        %1840 = vmatpush1.msra.mxu0 0.0
        %1841 = vmatprep.subr.mxu0 0.0
        %1842 = vmatpush1.msra.mxu0 0.0
        %1843 = vmatprep.mubr.f32.mxu0 0.0
        %1844 = vmatmul.mubr.f32.gmra.mrb[0].mxu0 %v1697
        %v1845 = vpop.f32.mrb[0].mxu0
        %v1846 = vadd.f32 %v1707, %v1845
        %v1847 = vpop.f32.mrb[0].mxu0
        %v1848 = vadd.f32 %v1707, %v1847
        %1849 = vdwg.mxu0
        %1850 = vmatprep.subr.mxu0 %v1574
        %1851 = vmatpush1.msra.mxu0 %v1573
        %1852 = vmatprep.subr.mxu0 %v1582
        %1853 = vmatpush1.msra.mxu0 %v1581
        %1854 = vmatprep.subr.mxu0 %v1590
        %1855 = vmatpush1.msra.mxu0 %v1589
        %1856 = vmatprep.subr.mxu0 %v1598
        %1857 = vmatpush1.msra.mxu0 %v1597
        %1858 = vmatprep.subr.mxu0 %v1606
        %1859 = vmatpush1.msra.mxu0 %v1605
        %1860 = vmatprep.subr.mxu0 %v1614
        %1861 = vmatpush1.msra.mxu0 %v1613
        %1862 = vmatprep.subr.mxu0 %v1622
        %1863 = vmatpush1.msra.mxu0 %v1621
        %1864 = vmatprep.subr.mxu0 %v1630
        %1865 = vmatpush1.msra.mxu0 %v1629
        %1866 = vmatprep.subr.mxu0 %v1638
        %1867 = vmatpush1.msra.mxu0 %v1637
        %1868 = vmatprep.subr.mxu0 %v1646
        %1869 = vmatpush1.msra.mxu0 %v1645
        %1870 = vmatprep.subr.mxu0 %v1654
        %1871 = vmatpush1.msra.mxu0 %v1653
        %1872 = vmatprep.subr.mxu0 %v1662
        %1873 = vmatpush1.msra.mxu0 %v1661
        %1874 = vmatprep.subr.mxu0 %v1670
        %1875 = vmatpush1.msra.mxu0 %v1669
        %1876 = vmatprep.subr.mxu0 %v1678
        %1877 = vmatpush1.msra.mxu0 %v1677
        %1878 = vmatprep.subr.mxu0 %v1686
        %1879 = vmatpush1.msra.mxu0 %v1685
        %1880 = vmatprep.subr.mxu0 %v1694
        %1881 = vmatpush1.msra.mxu0 %v1693
        %1882 = vmatprep.subr.mxu0 0.0
        %1883 = vmatpush1.msra.mxu0 0.0
        %1884 = vmatprep.subr.mxu0 0.0
        %1885 = vmatpush1.msra.mxu0 0.0
        %1886 = vmatprep.subr.mxu0 0.0
        %1887 = vmatpush1.msra.mxu0 0.0
        %1888 = vmatprep.subr.mxu0 0.0
        %1889 = vmatpush1.msra.mxu0 0.0
        %1890 = vmatprep.subr.mxu0 0.0
        %1891 = vmatpush1.msra.mxu0 0.0
        %1892 = vmatprep.subr.mxu0 0.0
        %1893 = vmatpush1.msra.mxu0 0.0
        %1894 = vmatprep.subr.mxu0 0.0
        %1895 = vmatpush1.msra.mxu0 0.0
        %1896 = vmatprep.subr.mxu0 0.0
        %1897 = vmatpush1.msra.mxu0 0.0
        %1898 = vmatprep.subr.mxu0 0.0
        %1899 = vmatpush1.msra.mxu0 0.0
        %1900 = vmatprep.subr.mxu0 0.0
        %1901 = vmatpush1.msra.mxu0 0.0
        %1902 = vmatprep.subr.mxu0 0.0
        %1903 = vmatpush1.msra.mxu0 0.0
        %1904 = vmatprep.subr.mxu0 0.0
        %1905 = vmatpush1.msra.mxu0 0.0
        %1906 = vmatprep.subr.mxu0 0.0
        %1907 = vmatpush1.msra.mxu0 0.0
        %1908 = vmatprep.subr.mxu0 0.0
        %1909 = vmatpush1.msra.mxu0 0.0
        %1910 = vmatprep.subr.mxu0 0.0
        %1911 = vmatpush1.msra.mxu0 0.0
        %1912 = vmatprep.subr.mxu0 0.0
        %1913 = vmatpush1.msra.mxu0 0.0
        %1914 = vmatprep.mubr.f32.mxu0 0.0
        %1915 = vmatmul.mubr.f32.gmra.mrb[0].mxu0 %v1697
        %v1916 = vpop.f32.mrb[0].mxu0
        %v1917 = vadd.f32 %v1707, %v1916
        %v1918 = vpop.f32.mrb[0].mxu0
        %v1919 = vadd.f32 %v1707, %v1918
        %1920 = vdwg.mxu0
        %1921 = vmatprep.subr.mxu0 %v1576
        %1922 = vmatpush1.msra.mxu0 %v1575
        %1923 = vmatprep.subr.mxu0 %v1584
        %1924 = vmatpush1.msra.mxu0 %v1583
        %1925 = vmatprep.subr.mxu0 %v1592
        %1926 = vmatpush1.msra.mxu0 %v1591
        %1927 = vmatprep.subr.mxu0 %v1600
        %1928 = vmatpush1.msra.mxu0 %v1599
        %1929 = vmatprep.subr.mxu0 %v1608
        %1930 = vmatpush1.msra.mxu0 %v1607
        %1931 = vmatprep.subr.mxu0 %v1616
        %1932 = vmatpush1.msra.mxu0 %v1615
        %1933 = vmatprep.subr.mxu0 %v1624
        %1934 = vmatpush1.msra.mxu0 %v1623
        %1935 = vmatprep.subr.mxu0 %v1632
        %1936 = vmatpush1.msra.mxu0 %v1631
        %1937 = vmatprep.subr.mxu0 %v1640
        %1938 = vmatpush1.msra.mxu0 %v1639
        %1939 = vmatprep.subr.mxu0 %v1648
        %1940 = vmatpush1.msra.mxu0 %v1647
        %1941 = vmatprep.subr.mxu0 %v1656
        %1942 = vmatpush1.msra.mxu0 %v1655
        %1943 = vmatprep.subr.mxu0 %v1664
        %1944 = vmatpush1.msra.mxu0 %v1663
        %1945 = vmatprep.subr.mxu0 %v1672
        %1946 = vmatpush1.msra.mxu0 %v1671
        %1947 = vmatprep.subr.mxu0 %v1680
        %1948 = vmatpush1.msra.mxu0 %v1679
        %1949 = vmatprep.subr.mxu0 %v1688
        %1950 = vmatpush1.msra.mxu0 %v1687
        %1951 = vmatprep.subr.mxu0 %v1696
        %1952 = vmatpush1.msra.mxu0 %v1695
        %1953 = vmatprep.subr.mxu0 0.0
        %1954 = vmatpush1.msra.mxu0 0.0
        %1955 = vmatprep.subr.mxu0 0.0
        %1956 = vmatpush1.msra.mxu0 0.0
        %1957 = vmatprep.subr.mxu0 0.0
        %1958 = vmatpush1.msra.mxu0 0.0
        %1959 = vmatprep.subr.mxu0 0.0
        %1960 = vmatpush1.msra.mxu0 0.0
        %1961 = vmatprep.subr.mxu0 0.0
        %1962 = vmatpush1.msra.mxu0 0.0
        %1963 = vmatprep.subr.mxu0 0.0
        %1964 = vmatpush1.msra.mxu0 0.0
        %1965 = vmatprep.subr.mxu0 0.0
        %1966 = vmatpush1.msra.mxu0 0.0
        %1967 = vmatprep.subr.mxu0 0.0
        %1968 = vmatpush1.msra.mxu0 0.0
        %1969 = vmatprep.subr.mxu0 0.0
        %1970 = vmatpush1.msra.mxu0 0.0
        %1971 = vmatprep.subr.mxu0 0.0
        %1972 = vmatpush1.msra.mxu0 0.0
        %1973 = vmatprep.subr.mxu0 0.0
        %1974 = vmatpush1.msra.mxu0 0.0
        %1975 = vmatprep.subr.mxu0 0.0
        %1976 = vmatpush1.msra.mxu0 0.0
        %1977 = vmatprep.subr.mxu0 0.0
        %1978 = vmatpush1.msra.mxu0 0.0
        %1979 = vmatprep.subr.mxu0 0.0
        %1980 = vmatpush1.msra.mxu0 0.0
        %1981 = vmatprep.subr.mxu0 0.0
        %1982 = vmatpush1.msra.mxu0 0.0
        %1983 = vmatprep.subr.mxu0 0.0
        %1984 = vmatpush1.msra.mxu0 0.0
        %1985 = vmatprep.mubr.f32.mxu0 0.0
        %1986 = vmatmul.mubr.f32.gmra.mrb[0].mxu0 %v1697
        %v1987 = vpop.f32.mrb[0].mxu0
        %v1988 = vadd.f32 %v1707, %v1987
        %v1989 = vpop.f32.mrb[0].mxu0
        %v1990 = vadd.f32 %v1707, %v1989
        %1991 = vdwg.mxu0
        %v2000 = vcombine.low %v1775, %v1777
        %v2001 = vcombine.low %v1846, %v1848
        %v2002 = vcombine.low %v1917, %v1919
        %v2003 = vcombine.low %v1988, %v1990
        %v2005 = vunpack.c.l.s4 1966171168
        %v2006 = vunpack.c.0.s8 %v2005
        %v2007 = vlaneseq
        %v2008 = vshrl.u32 %v2007, 7
        %v2009 = vsub.s32 %v2006, %v2008
        %v2010 = vrot.slane %v2000, %v2009
        %v2012 = vunpack.c.l.s4 1966171168
        %v2013 = vunpack.c.0.s8 %v2012
        %v2014 = vlaneseq
        %v2015 = vshrl.u32 %v2014, 7
        %v2016 = vsub.s32 %v2013, %v2015
        %v2017 = vrot.slane %v2001, %v2016
        %v2019 = vunpack.c.l.s4 1966171168
        %v2020 = vunpack.c.0.s8 %v2019
        %v2021 = vlaneseq
        %v2022 = vshrl.u32 %v2021, 7
        %v2023 = vsub.s32 %v2020, %v2022
        %v2024 = vrot.slane %v2002, %v2023
        %v2026 = vunpack.c.l.s4 1966171168
        %v2027 = vunpack.c.0.s8 %v2026
        %v2028 = vlaneseq
        %v2029 = vshrl.u32 %v2028, 7
        %v2030 = vsub.s32 %v2027, %v2029
        %v2031 = vrot.slane %v2003, %v2030
        %v2032 = vcombine.low %v2010, %v2017
        %v2033 = vcombine.low %v2024, %v2031
        %v2035 = vunpack.c.l.s4 1966171168
        %v2036 = vunpack.c.0.s8 %v2035
        %v2037 = vlaneseq
        %v2038 = vshrl.u32 %v2037, 7
        %v2039 = vsub.s32 %v2036, %v2038
        %v2040 = vrot.slane %v2032, %v2039
        %v2042 = vunpack.c.l.s4 1966171168
        %v2043 = vunpack.c.0.s8 %v2042
        %v2044 = vlaneseq
        %v2045 = vshrl.u32 %v2044, 7
        %v2046 = vsub.s32 %v2043, %v2045
        %v2047 = vrot.slane %v2033, %v2046
        %v2048 = vcombine.low %v2040, %v2047
        %2050 = vst [vmem:[%s232] sm:$0xff] %v2048
        %s2051 = sand.u32 %s139, 1
        %s2052 = scalar_lea.sflag [#allocation4], %s2051
        %s2053 = sand.u32 %s139, 1
        %s2054 = smul.addr %s2053, 8
        %s2055 = scalar_lea.vmem [#allocation3], %s2054
        // Predicated region
        $region41: #{tpu_custom_call.1} parent=39 // pred_check
          %p2056 = pneg %p149
        $region42: #{tpu_custom_call.1} parent=39 // pred_check_branch
          %2058 = sbr.rel (%p2056) target = $region44
        $region43: #{tpu_custom_call.1} parent=39 // pred_region
          %s2059 = smul.u32 8, %s21
          %s2060 = ssub.s32 33, %s2059
          %p2061 = scmp.lt.s32.totalorder %s2060, 8
          %s2062 = scalar_select %p2061, %s2060, 8
          %s2063 = smul.u32 16, %s2062
          %s2065 = ssub.s32 128, %s2063
          %2066 = vsyncadd %s2052, %s2065
          %p2067 = scmp.ne.s32.totalorder 0, %s2063
          %s2068 = smul.addr %s2059, 16
          %s2069 = scalar_lea.hbm %s5, %s2068
          %s2070 = sshll.u32 %s2062, 4
          %s2071 = sshll.u32 %s2055, 4
          %s2072 = int_to_ptr.vmem [resolvable:$true] %s2071
          %2074 = dma.vmem_to_hbm [thread:$0]  (%p2067), %s2072, %s2070, %s2069, %s2052
        $region44: #{tpu_custom_call.1} parent=39 // pred_fallthru
          _
      $region40: #{tpu_custom_call.1} parent=5 // pred_fallthru
        _
      %p2075 = scmp.le.s32.totalorder 2, %s16
      // Predicated region
      $region45: #{tpu_custom_call.1} parent=5 // pred_check
        %p2076 = pneg %p2075
      $region46: #{tpu_custom_call.1} parent=5 // pred_check_branch
        %2078 = sbr.rel (%p2076) target = $region48
      $region47: #{tpu_custom_call.1} parent=5 // pred_region
        %s2079 = ssub.s32 %s16, 2
        // Predicated region
        $region49: #{tpu_custom_call.1} parent=47 // pred_check
          %p2080 = pneg %p155
        $region50: #{tpu_custom_call.1} parent=47 // pred_check_branch
          %2082 = sbr.rel (%p2080) target = $region52
        $region51: #{tpu_custom_call.1} parent=47 // pred_region
          %s2083 = sand.u32 %s140, 1
          %s2084 = scalar_lea.sflag [#allocation4], %s2083
          %s2085 = sand.u32 %s140, 1
          %s2086 = smul.addr %s2085, 8
          %s2087 = scalar_lea.vmem [#allocation3], %s2086
          %2088 = dma.done %s2084, 128
        $region52: #{tpu_custom_call.1} parent=47 // pred_fallthru
          _
      $region48: #{tpu_custom_call.1} parent=5 // pred_fallthru
        _
    $region6: #{tpu_custom_call.1} parent=1 // loop_footer
      %s20 = sadd.s32 1, %s16
    $region7: #{tpu_custom_call.1} parent=1 // loop_footer_branch
      %15 = sbr.rel target = $region3
    $region8: #{tpu_custom_call.1} parent=1 // loop_exit
      _
    %2089 = vsyncpa [#allocation4], 1
    %s2090 = scalar_lea.sflag [#allocation4], 1
    %2091 = vsyncpa %s2090, 1

</llo_original>
